<compile_context>
chip_gen: v6e
topology: v6e:2x2x1
jax: 0.10.0
libtpu: 0.0.40
codegen_flags: <defaults>
</compile_context>

<pallas_src>
import math

import jax
import jax.numpy as jnp
import numpy as np
from jax import lax
from jax.experimental import pallas as pl
from jax.experimental.pallas import tpu as pltpu  # noqa: F401  (TPU backend)

# ---------------- config (small, consistent with the module) ----------------
B = 2              # batch
S = 8              # sequence length
H = 32             # hidden_size
NUM_HEADS = 4      # num_attention_heads
NUM_KV_HEADS = 2   # num_key_value_heads (GQA)
HEAD_DIM = H // NUM_HEADS
N_REP = NUM_HEADS // NUM_KV_HEADS
INTERMEDIATE = 64  # intermediate_size
EPS = 1e-6         # rms_norm_eps
ROPE_BASE = 10000.0

QD = NUM_HEADS * HEAD_DIM        # 32  (q width)
KD = NUM_KV_HEADS * HEAD_DIM     # 16  (k/v width)


def _rotate_half_last(x):
    half = x.shape[-1] // 2
    return jnp.concatenate((-x[..., half:], x[..., :half]), axis=-1)


# ----------------------------- Pallas kernel --------------------------------
def decoder_layer_kernel(x_ref, cos_ref, sin_ref, wqkv_ref, wo_ref,
                         wgu_ref, wd_ref, out_ref):
    x = x_ref[...].astype(jnp.float32)                        # (B*S, H)

    # ---- input RMSNorm (gamma folded into wqkv rows in the wrapper) ----
    var = jnp.mean(x * x, axis=-1, keepdims=True)
    h = x * lax.rsqrt(var + EPS)

    # ---- fused q / k / v / rot(q) / rot(k) projection (one MXU pass) ----
    # q columns already carry the 1/sqrt(head_dim) score scale.
    proj = jnp.dot(h, wqkv_ref[...], preferred_element_type=jnp.float32)
    q = proj[:, :QD]
    k = proj[:, QD:QD + KD]
    v = proj[:, QD + KD:QD + 2 * KD]
    q_rot = proj[:, QD + 2 * KD:2 * QD + 2 * KD]
    k_rot = proj[:, 2 * QD + 2 * KD:]

    # ---- RoPE (rotate_half already folded into q_rot / k_rot weights) ----
    cosv = cos_ref[...]                                       # (B*S, QD)
    sinv = sin_ref[...]
    q = q * cosv + q_rot * sinv                               # (B*S, QD)
    k = k * cosv[:, :KD] + k_rot * sinv[:, :KD]               # (B*S, KD)

    # ---- causal mask (shared across batches and heads) ----
    row = lax.broadcasted_iota(jnp.int32, (S, S), 0)
    col = lax.broadcasted_iota(jnp.int32, (S, S), 1)
    causal = jnp.where(col <= row, 0.0, jnp.finfo(jnp.float32).min)

    wo = wo_ref[...]                                          # (H, H)
    contract_last = (((1,), (1,)), ((), ()))                  # q @ k (no .T)

    attn_rows = []
    for b in range(B):                                        # static unroll
        r0 = b * S
        qb = q[r0:r0 + S]
        kb = k[r0:r0 + S]
        vb = v[r0:r0 + S]
        acc = jnp.zeros((S, H), jnp.float32)
        for hd in range(NUM_HEADS):                           # static unroll
            kv = hd // N_REP                                  # repeat_kv map
            qh = qb[:, hd * HEAD_DIM:(hd + 1) * HEAD_DIM]
            kh = kb[:, kv * HEAD_DIM:(kv + 1) * HEAD_DIM]
            vh = vb[:, kv * HEAD_DIM:(kv + 1) * HEAD_DIM]
            sc = lax.dot_general(qh, kh, contract_last,
                                 preferred_element_type=jnp.float32) + causal
            m = jnp.max(sc, axis=-1, keepdims=True)
            e = jnp.exp(sc - m)
            p = e * pl.reciprocal(jnp.sum(e, axis=-1, keepdims=True),
                                  approx=True)
            pv = jnp.dot(p, vh, preferred_element_type=jnp.float32)  # (S, dh)
            # o_proj folded into the head loop: accumulate partial products
            acc = acc + jnp.dot(pv, wo[hd * HEAD_DIM:(hd + 1) * HEAD_DIM, :],
                                preferred_element_type=jnp.float32)
        attn_rows.append(acc)
    attn = jnp.concatenate(attn_rows, axis=0)                 # (B*S, H)

    # ---- residual + post-attention RMSNorm (gamma folded into wgu rows) ----
    h1 = x + attn
    var2 = jnp.mean(h1 * h1, axis=-1, keepdims=True)
    h2 = h1 * lax.rsqrt(var2 + EPS)

    # ---- SwiGLU MLP: fused gate+up (lane-dense 128-wide output) ----
    gu = jnp.dot(h2, wgu_ref[...], preferred_element_type=jnp.float32)
    g = gu[:, :INTERMEDIATE]
    u = gu[:, INTERMEDIATE:]
    mlp = (g * jax.nn.sigmoid(g)) * u                         # silu(gate) * up
    d = jnp.dot(mlp, wd_ref[...], preferred_element_type=jnp.float32)

    out_ref[...] = (h1 + d).astype(out_ref.dtype)


# ------------------------------- wrapper -------------------------------------
def _fold_rotate_half_into_weight(w, n_heads):
    """W_rot such that h @ W_rot == rotate_half_per_head(h @ W) (exact)."""
    in_f, out_f = w.shape
    d = out_f // n_heads
    wr = w.reshape(in_f, n_heads, d)
    wr = jnp.concatenate((-wr[..., d // 2:], wr[..., :d // 2]), axis=-1)
    return wr.reshape(in_f, out_f)


def fuse_params(params):
    """One-time weight fusion done outside the kernel.

    Folds: rotate_half permutation, RMSNorm gammas (diagonal pre-scale of a
    linear layer), and the 1/sqrt(head_dim) attention scale.
    """
    ln1 = params["ln1"][:, None]                  # (H, 1) row scale
    ln2 = params["ln2"][:, None]
    scale = 1.0 / math.sqrt(HEAD_DIM)

    wq = params["wq"] * ln1
    wk = params["wk"] * ln1
    wv = params["wv"] * ln1
    wq_rot = _fold_rotate_half_into_weight(wq, NUM_HEADS)
    wk_rot = _fold_rotate_half_into_weight(wk, NUM_KV_HEADS)
    wqkv = jnp.concatenate(
        [wq * scale, wk, wv, wq_rot * scale, wk_rot], axis=1)     # (H, 112)

    wgu = jnp.concatenate([params["wg"] * ln2, params["wu"] * ln2],
                          axis=1)                                 # (H, 128)
    return {"wqkv": wqkv, "wo": params["wo"], "wgu": wgu, "wd": params["wd"]}


def llama_decoder_layer(x, cos, sin, fused):
    """x: (B, S, H); cos/sin: (S, HEAD_DIM); fused: output of fuse_params."""
    x2d = x.reshape(B * S, H)
    # positions are identical per batch -> tile across heads and batch once
    cos_full = jnp.tile(cos, (B, NUM_HEADS))   # (B*S, QD)
    sin_full = jnp.tile(sin, (B, NUM_HEADS))
    out2d = pl.pallas_call(
        decoder_layer_kernel,                  # grid=() -> single invocation,
        out_shape=jax.ShapeDtypeStruct((B * S, H), x.dtype),  # all operands VMEM-resident
    )(x2d, cos_full, sin_full, fused["wqkv"], fused["wo"],
      fused["wgu"], fused["wd"])
    return out2d.reshape(B, S, H)


# --------------------------- pure-JAX reference -------------------------------
def reference_decoder_layer(x, cos, sin, params):
    xf = x.astype(jnp.float32)
    var = jnp.mean(xf * xf, axis=-1, keepdims=True)
    h = xf * lax.rsqrt(var + EPS) * params["ln1"]
    q = h @ params["wq"]
    k = h @ params["wk"]
    v = h @ params["wv"]
    q = q.reshape(B, S, NUM_HEADS, HEAD_DIM).transpose(0, 2, 1, 3)
    k = k.reshape(B, S, NUM_KV_HEADS, HEAD_DIM).transpose(0, 2, 1, 3)
    v = v.reshape(B, S, NUM_KV_HEADS, HEAD_DIM).transpose(0, 2, 1, 3)
    c = cos[:, None, :, :]
    s = sin[:, None, :, :]
    q = q * c + _rotate_half_last(q) * s
    k = k * c + _rotate_half_last(k) * s
    k = jnp.repeat(k, N_REP, axis=1)
    v = jnp.repeat(v, N_REP, axis=1)
    scores = jnp.einsum("bhqd,bhkd->bhqk", q, k) / math.sqrt(HEAD_DIM)
    causal = jnp.where(jnp.arange(S)[:, None] >= jnp.arange(S)[None, :],
                       0.0, jnp.finfo(jnp.float32).min)
    scores = scores + causal
    probs = jax.nn.softmax(scores, axis=-1)
    attn = jnp.einsum("bhqk,bhkd->bhqd", probs, v)
    attn = attn.transpose(0, 2, 1, 3).reshape(B, S, H) @ params["wo"]
    h1 = xf + attn
    var2 = jnp.mean(h1 * h1, axis=-1, keepdims=True)
    h2 = h1 * lax.rsqrt(var2 + EPS) * params["ln2"]
    g = h2 @ params["wg"]
    u = h2 @ params["wu"]
    d = (jax.nn.silu(g) * u) @ params["wd"]
    return h1 + d


# ---------------------------------- main --------------------------------------
if __name__ == "__main__":
    key = jax.random.PRNGKey(0)
    keys = jax.random.split(key, 11)

    x = jax.random.normal(keys[0], (B, S, H), dtype=jnp.float32)

    # torch nn.Linear stores (out, in); sample in that convention, transpose to
    # (in, out) so the kernel computes y = x @ W.
    def linear_w(k, out_f, in_f):
        return (0.05 * jax.random.normal(k, (out_f, in_f), dtype=jnp.float32)).T

    params = {
        "wq": linear_w(keys[1], NUM_HEADS * HEAD_DIM, H),
        "wk": linear_w(keys[2], NUM_KV_HEADS * HEAD_DIM, H),
        "wv": linear_w(keys[3], NUM_KV_HEADS * HEAD_DIM, H),
        "wo": linear_w(keys[4], H, H),
        "wg": linear_w(keys[5], INTERMEDIATE, H),
        "wu": linear_w(keys[6], INTERMEDIATE, H),
        "wd": linear_w(keys[7], H, INTERMEDIATE),
        # LlamaRMSNorm weights (non-unit here so the weight-folding is
        # actually exercised by the correctness check).
        "ln1": 1.0 + 0.1 * jax.random.normal(keys[8], (H,), dtype=jnp.float32),
        "ln2": 1.0 + 0.1 * jax.random.normal(keys[9], (H,), dtype=jnp.float32),
    }

    # rotary embedding table (LlamaRotaryEmbedding) — glue, computed in JAX.
    pos = jnp.arange(S, dtype=jnp.float32)
    inv_freq = 1.0 / (ROPE_BASE ** (jnp.arange(0, HEAD_DIM, 2,
                                                dtype=jnp.float32) / HEAD_DIM))
    freqs = pos[:, None] * inv_freq[None, :]                   # (S, dh/2)
    emb = jnp.concatenate((freqs, freqs), axis=-1)             # (S, dh)
    cos = jnp.cos(emb)
    sin = jnp.sin(emb)

    fused = fuse_params(params)
    out = jax.block_until_ready(llama_decoder_layer(x, cos, sin, fused))

    cos_b = jnp.broadcast_to(cos[None], (B, S, HEAD_DIM))
    sin_b = jnp.broadcast_to(sin[None], (B, S, HEAD_DIM))
    ref = jax.block_until_ready(reference_decoder_layer(x, cos_b, sin_b, params))
    np.testing.assert_allclose(np.asarray(out), np.asarray(ref),
                               rtol=2e-3, atol=2e-3)

    print("KERNEL_OK")
</pallas_src>

<mosaic_0001>
module attributes {stable_mosaic.version = 11 : i64} {
  func.func @decoder_layer_kernel(%arg0: memref<16x32xf32, #tpu.memory_space<vmem>>, %arg1: memref<16x32xf32, #tpu.memory_space<vmem>>, %arg2: memref<16x32xf32, #tpu.memory_space<vmem>>, %arg3: memref<32x112xf32, #tpu.memory_space<vmem>>, %arg4: memref<32x32xf32, #tpu.memory_space<vmem>>, %arg5: memref<32x128xf32, #tpu.memory_space<vmem>>, %arg6: memref<64x32xf32, #tpu.memory_space<vmem>>, %arg7: memref<16x32xf32, #tpu.memory_space<vmem>>) attributes {dimension_semantics = [], scalar_prefetch = 0 : i64, scratch_operands = 0 : i64, tpu.core_type = #tpu.core_type<tc>} {
    %c0 = arith.constant 0 : index
    %c0_0 = arith.constant 0 : index
    %0 = vector.load %arg0[%c0, %c0_0] : memref<16x32xf32, #tpu.memory_space<vmem>>, vector<16x32xf32>
    %1 = arith.mulf %0, %0 : vector<16x32xf32>
    %cst = arith.constant dense<0.000000e+00> : vector<16xf32>
    %2 = vector.multi_reduction <add>, %1, %cst [1] : vector<16x32xf32> to vector<16xf32>
    %3 = vector.shape_cast %2 : vector<16xf32> to vector<16x1xf32>
    %cst_1 = arith.constant 3.200000e+01 : f32
    %4 = vector.broadcast %cst_1 : f32 to vector<16x1xf32>
    %5 = arith.divf %3, %4 : vector<16x1xf32>
    %cst_2 = arith.constant 9.99999997E-7 : f32
    %6 = vector.broadcast %cst_2 : f32 to vector<16x1xf32>
    %7 = arith.addf %5, %6 : vector<16x1xf32>
    %8 = math.rsqrt %7 : vector<16x1xf32>
    %9 = vector.broadcast %8 : vector<16x1xf32> to vector<16x32xf32>
    %10 = arith.mulf %0, %9 : vector<16x32xf32>
    %c0_3 = arith.constant 0 : index
    %c0_4 = arith.constant 0 : index
    %11 = vector.load %arg3[%c0_3, %c0_4] : memref<32x112xf32, #tpu.memory_space<vmem>>, vector<32x112xf32>
    %cst_5 = arith.constant dense<0.000000e+00> : vector<16x112xf32>
    %12 = tpu.matmul %10, %11, %cst_5 {dimension_numbers = #tpu.dot_dimension_numbers<[1], [0], [0], [1], [0, 0, 1, 1], [], []>} : vector<16x32xf32>, vector<32x112xf32>, vector<16x112xf32> -> vector<16x112xf32>
    %13 = vector.extract_strided_slice %12 {offsets = [0, 0], sizes = [16, 32], strides = [1, 1]} : vector<16x112xf32> to vector<16x32xf32>
    %14 = vector.extract_strided_slice %12 {offsets = [0, 32], sizes = [16, 16], strides = [1, 1]} : vector<16x112xf32> to vector<16x16xf32>
    %15 = vector.extract_strided_slice %12 {offsets = [0, 48], sizes = [16, 16], strides = [1, 1]} : vector<16x112xf32> to vector<16x16xf32>
    %16 = vector.extract_strided_slice %12 {offsets = [0, 64], sizes = [16, 32], strides = [1, 1]} : vector<16x112xf32> to vector<16x32xf32>
    %17 = vector.extract_strided_slice %12 {offsets = [0, 96], sizes = [16, 16], strides = [1, 1]} : vector<16x112xf32> to vector<16x16xf32>
    %c0_6 = arith.constant 0 : index
    %c0_7 = arith.constant 0 : index
    %18 = vector.load %arg1[%c0_6, %c0_7] : memref<16x32xf32, #tpu.memory_space<vmem>>, vector<16x32xf32>
    %c0_8 = arith.constant 0 : index
    %c0_9 = arith.constant 0 : index
    %19 = vector.load %arg2[%c0_8, %c0_9] : memref<16x32xf32, #tpu.memory_space<vmem>>, vector<16x32xf32>
    %20 = arith.mulf %13, %18 : vector<16x32xf32>
    %21 = arith.mulf %16, %19 : vector<16x32xf32>
    %22 = arith.addf %20, %21 : vector<16x32xf32>
    %23 = vector.extract_strided_slice %18 {offsets = [0, 0], sizes = [16, 16], strides = [1, 1]} : vector<16x32xf32> to vector<16x16xf32>
    %24 = arith.mulf %14, %23 : vector<16x16xf32>
    %25 = vector.extract_strided_slice %19 {offsets = [0, 0], sizes = [16, 16], strides = [1, 1]} : vector<16x32xf32> to vector<16x16xf32>
    %26 = arith.mulf %17, %25 : vector<16x16xf32>
    %27 = arith.addf %24, %26 : vector<16x16xf32>
    %28 = tpu.iota {dimensions = array<i32: 0>} : vector<8x8xi32>
    %29 = tpu.iota {dimensions = array<i32: 1>} : vector<8x8xi32>
    %30 = arith.cmpi sle, %29, %28 : vector<8x8xi32>
    %cst_10 = arith.constant 0.000000e+00 : f32
    %cst_11 = arith.constant -3.40282347E+38 : f32
    %31 = vector.broadcast %cst_10 : f32 to vector<8x8xf32>
    %32 = vector.broadcast %cst_11 : f32 to vector<8x8xf32>
    %33 = arith.select %30, %31, %32 : vector<8x8xi1>, vector<8x8xf32>
    %c0_12 = arith.constant 0 : index
    %c0_13 = arith.constant 0 : index
    %34 = vector.load %arg4[%c0_12, %c0_13] : memref<32x32xf32, #tpu.memory_space<vmem>>, vector<32x32xf32>
    %35 = vector.extract_strided_slice %22 {offsets = [0, 0], sizes = [8, 32], strides = [1, 1]} : vector<16x32xf32> to vector<8x32xf32>
    %36 = vector.extract_strided_slice %27 {offsets = [0, 0], sizes = [8, 16], strides = [1, 1]} : vector<16x16xf32> to vector<8x16xf32>
    %37 = vector.extract_strided_slice %15 {offsets = [0, 0], sizes = [8, 16], strides = [1, 1]} : vector<16x16xf32> to vector<8x16xf32>
    %cst_14 = arith.constant 0.000000e+00 : f32
    %38 = vector.broadcast %cst_14 : f32 to vector<8x32xf32>
    %39 = vector.extract_strided_slice %35 {offsets = [0, 0], sizes = [8, 8], strides = [1, 1]} : vector<8x32xf32> to vector<8x8xf32>
    %40 = vector.extract_strided_slice %36 {offsets = [0, 0], sizes = [8, 8], strides = [1, 1]} : vector<8x16xf32> to vector<8x8xf32>
    %41 = vector.extract_strided_slice %37 {offsets = [0, 0], sizes = [8, 8], strides = [1, 1]} : vector<8x16xf32> to vector<8x8xf32>
    %cst_15 = arith.constant dense<0.000000e+00> : vector<8x8xf32>
    %42 = tpu.matmul %39, %40, %cst_15 {dimension_numbers = #tpu.dot_dimension_numbers<[1], [1], [0], [0], [0, 0, 1, 0], [], []>} : vector<8x8xf32>, vector<8x8xf32>, vector<8x8xf32> -> vector<8x8xf32>
    %43 = arith.addf %42, %33 : vector<8x8xf32>
    %cst_16 = arith.constant dense<0xFF800000> : vector<8xf32>
    %44 = vector.multi_reduction <maximumf>, %43, %cst_16 [1] : vector<8x8xf32> to vector<8xf32>
    %45 = vector.shape_cast %44 : vector<8xf32> to vector<8x1xf32>
    %46 = vector.broadcast %45 : vector<8x1xf32> to vector<8x8xf32>
    %47 = arith.subf %43, %46 : vector<8x8xf32>
    %48 = math.exp %47 : vector<8x8xf32>
    %cst_17 = arith.constant dense<0.000000e+00> : vector<8xf32>
    %49 = vector.multi_reduction <add>, %48, %cst_17 [1] : vector<8x8xf32> to vector<8xf32>
    %50 = vector.shape_cast %49 : vector<8xf32> to vector<8x1xf32>
    %51 = tpu.reciprocal %50 {approx = true} : vector<8x1xf32> -> vector<8x1xf32>
    %52 = vector.broadcast %51 : vector<8x1xf32> to vector<8x8xf32>
    %53 = arith.mulf %48, %52 : vector<8x8xf32>
    %cst_18 = arith.constant dense<0.000000e+00> : vector<8x8xf32>
    %54 = tpu.matmul %53, %41, %cst_18 {dimension_numbers = #tpu.dot_dimension_numbers<[1], [0], [0], [1], [0, 0, 1, 1], [], []>} : vector<8x8xf32>, vector<8x8xf32>, vector<8x8xf32> -> vector<8x8xf32>
    %55 = vector.extract_strided_slice %34 {offsets = [0, 0], sizes = [8, 32], strides = [1, 1]} : vector<32x32xf32> to vector<8x32xf32>
    %cst_19 = arith.constant dense<0.000000e+00> : vector<8x32xf32>
    %56 = tpu.matmul %54, %55, %cst_19 {dimension_numbers = #tpu.dot_dimension_numbers<[1], [0], [0], [1], [0, 0, 1, 1], [], []>} : vector<8x8xf32>, vector<8x32xf32>, vector<8x32xf32> -> vector<8x32xf32>
    %57 = arith.addf %38, %56 : vector<8x32xf32>
    %58 = vector.extract_strided_slice %35 {offsets = [0, 8], sizes = [8, 8], strides = [1, 1]} : vector<8x32xf32> to vector<8x8xf32>
    %59 = vector.extract_strided_slice %36 {offsets = [0, 0], sizes = [8, 8], strides = [1, 1]} : vector<8x16xf32> to vector<8x8xf32>
    %60 = vector.extract_strided_slice %37 {offsets = [0, 0], sizes = [8, 8], strides = [1, 1]} : vector<8x16xf32> to vector<8x8xf32>
    %cst_20 = arith.constant dense<0.000000e+00> : vector<8x8xf32>
    %61 = tpu.matmul %58, %59, %cst_20 {dimension_numbers = #tpu.dot_dimension_numbers<[1], [1], [0], [0], [0, 0, 1, 0], [], []>} : vector<8x8xf32>, vector<8x8xf32>, vector<8x8xf32> -> vector<8x8xf32>
    %62 = arith.addf %61, %33 : vector<8x8xf32>
    %cst_21 = arith.constant dense<0xFF800000> : vector<8xf32>
    %63 = vector.multi_reduction <maximumf>, %62, %cst_21 [1] : vector<8x8xf32> to vector<8xf32>
    %64 = vector.shape_cast %63 : vector<8xf32> to vector<8x1xf32>
    %65 = vector.broadcast %64 : vector<8x1xf32> to vector<8x8xf32>
    %66 = arith.subf %62, %65 : vector<8x8xf32>
    %67 = math.exp %66 : vector<8x8xf32>
    %cst_22 = arith.constant dense<0.000000e+00> : vector<8xf32>
    %68 = vector.multi_reduction <add>, %67, %cst_22 [1] : vector<8x8xf32> to vector<8xf32>
    %69 = vector.shape_cast %68 : vector<8xf32> to vector<8x1xf32>
    %70 = tpu.reciprocal %69 {approx = true} : vector<8x1xf32> -> vector<8x1xf32>
    %71 = vector.broadcast %70 : vector<8x1xf32> to vector<8x8xf32>
    %72 = arith.mulf %67, %71 : vector<8x8xf32>
    %cst_23 = arith.constant dense<0.000000e+00> : vector<8x8xf32>
    %73 = tpu.matmul %72, %60, %cst_23 {dimension_numbers = #tpu.dot_dimension_numbers<[1], [0], [0], [1], [0, 0, 1, 1], [], []>} : vector<8x8xf32>, vector<8x8xf32>, vector<8x8xf32> -> vector<8x8xf32>
    %74 = vector.extract_strided_slice %34 {offsets = [8, 0], sizes = [8, 32], strides = [1, 1]} : vector<32x32xf32> to vector<8x32xf32>
    %cst_24 = arith.constant dense<0.000000e+00> : vector<8x32xf32>
    %75 = tpu.matmul %73, %74, %cst_24 {dimension_numbers = #tpu.dot_dimension_numbers<[1], [0], [0], [1], [0, 0, 1, 1], [], []>} : vector<8x8xf32>, vector<8x32xf32>, vector<8x32xf32> -> vector<8x32xf32>
    %76 = arith.addf %57, %75 : vector<8x32xf32>
    %77 = vector.extract_strided_slice %35 {offsets = [0, 16], sizes = [8, 8], strides = [1, 1]} : vector<8x32xf32> to vector<8x8xf32>
    %78 = vector.extract_strided_slice %36 {offsets = [0, 8], sizes = [8, 8], strides = [1, 1]} : vector<8x16xf32> to vector<8x8xf32>
    %79 = vector.extract_strided_slice %37 {offsets = [0, 8], sizes = [8, 8], strides = [1, 1]} : vector<8x16xf32> to vector<8x8xf32>
    %cst_25 = arith.constant dense<0.000000e+00> : vector<8x8xf32>
    %80 = tpu.matmul %77, %78, %cst_25 {dimension_numbers = #tpu.dot_dimension_numbers<[1], [1], [0], [0], [0, 0, 1, 0], [], []>} : vector<8x8xf32>, vector<8x8xf32>, vector<8x8xf32> -> vector<8x8xf32>
    %81 = arith.addf %80, %33 : vector<8x8xf32>
    %cst_26 = arith.constant dense<0xFF800000> : vector<8xf32>
    %82 = vector.multi_reduction <maximumf>, %81, %cst_26 [1] : vector<8x8xf32> to vector<8xf32>
    %83 = vector.shape_cast %82 : vector<8xf32> to vector<8x1xf32>
    %84 = vector.broadcast %83 : vector<8x1xf32> to vector<8x8xf32>
    %85 = arith.subf %81, %84 : vector<8x8xf32>
    %86 = math.exp %85 : vector<8x8xf32>
    %cst_27 = arith.constant dense<0.000000e+00> : vector<8xf32>
    %87 = vector.multi_reduction <add>, %86, %cst_27 [1] : vector<8x8xf32> to vector<8xf32>
    %88 = vector.shape_cast %87 : vector<8xf32> to vector<8x1xf32>
    %89 = tpu.reciprocal %88 {approx = true} : vector<8x1xf32> -> vector<8x1xf32>
    %90 = vector.broadcast %89 : vector<8x1xf32> to vector<8x8xf32>
    %91 = arith.mulf %86, %90 : vector<8x8xf32>
    %cst_28 = arith.constant dense<0.000000e+00> : vector<8x8xf32>
    %92 = tpu.matmul %91, %79, %cst_28 {dimension_numbers = #tpu.dot_dimension_numbers<[1], [0], [0], [1], [0, 0, 1, 1], [], []>} : vector<8x8xf32>, vector<8x8xf32>, vector<8x8xf32> -> vector<8x8xf32>
    %93 = vector.extract_strided_slice %34 {offsets = [16, 0], sizes = [8, 32], strides = [1, 1]} : vector<32x32xf32> to vector<8x32xf32>
    %cst_29 = arith.constant dense<0.000000e+00> : vector<8x32xf32>
    %94 = tpu.matmul %92, %93, %cst_29 {dimension_numbers = #tpu.dot_dimension_numbers<[1], [0], [0], [1], [0, 0, 1, 1], [], []>} : vector<8x8xf32>, vector<8x32xf32>, vector<8x32xf32> -> vector<8x32xf32>
    %95 = arith.addf %76, %94 : vector<8x32xf32>
    %96 = vector.extract_strided_slice %35 {offsets = [0, 24], sizes = [8, 8], strides = [1, 1]} : vector<8x32xf32> to vector<8x8xf32>
    %97 = vector.extract_strided_slice %36 {offsets = [0, 8], sizes = [8, 8], strides = [1, 1]} : vector<8x16xf32> to vector<8x8xf32>
    %98 = vector.extract_strided_slice %37 {offsets = [0, 8], sizes = [8, 8], strides = [1, 1]} : vector<8x16xf32> to vector<8x8xf32>
    %cst_30 = arith.constant dense<0.000000e+00> : vector<8x8xf32>
    %99 = tpu.matmul %96, %97, %cst_30 {dimension_numbers = #tpu.dot_dimension_numbers<[1], [1], [0], [0], [0, 0, 1, 0], [], []>} : vector<8x8xf32>, vector<8x8xf32>, vector<8x8xf32> -> vector<8x8xf32>
    %100 = arith.addf %99, %33 : vector<8x8xf32>
    %cst_31 = arith.constant dense<0xFF800000> : vector<8xf32>
    %101 = vector.multi_reduction <maximumf>, %100, %cst_31 [1] : vector<8x8xf32> to vector<8xf32>
    %102 = vector.shape_cast %101 : vector<8xf32> to vector<8x1xf32>
    %103 = vector.broadcast %102 : vector<8x1xf32> to vector<8x8xf32>
    %104 = arith.subf %100, %103 : vector<8x8xf32>
    %105 = math.exp %104 : vector<8x8xf32>
    %cst_32 = arith.constant dense<0.000000e+00> : vector<8xf32>
    %106 = vector.multi_reduction <add>, %105, %cst_32 [1] : vector<8x8xf32> to vector<8xf32>
    %107 = vector.shape_cast %106 : vector<8xf32> to vector<8x1xf32>
    %108 = tpu.reciprocal %107 {approx = true} : vector<8x1xf32> -> vector<8x1xf32>
    %109 = vector.broadcast %108 : vector<8x1xf32> to vector<8x8xf32>
    %110 = arith.mulf %105, %109 : vector<8x8xf32>
    %cst_33 = arith.constant dense<0.000000e+00> : vector<8x8xf32>
    %111 = tpu.matmul %110, %98, %cst_33 {dimension_numbers = #tpu.dot_dimension_numbers<[1], [0], [0], [1], [0, 0, 1, 1], [], []>} : vector<8x8xf32>, vector<8x8xf32>, vector<8x8xf32> -> vector<8x8xf32>
    %112 = vector.extract_strided_slice %34 {offsets = [24, 0], sizes = [8, 32], strides = [1, 1]} : vector<32x32xf32> to vector<8x32xf32>
    %cst_34 = arith.constant dense<0.000000e+00> : vector<8x32xf32>
    %113 = tpu.matmul %111, %112, %cst_34 {dimension_numbers = #tpu.dot_dimension_numbers<[1], [0], [0], [1], [0, 0, 1, 1], [], []>} : vector<8x8xf32>, vector<8x32xf32>, vector<8x32xf32> -> vector<8x32xf32>
    %114 = arith.addf %95, %113 : vector<8x32xf32>
    %115 = vector.extract_strided_slice %22 {offsets = [8, 0], sizes = [8, 32], strides = [1, 1]} : vector<16x32xf32> to vector<8x32xf32>
    %116 = vector.extract_strided_slice %27 {offsets = [8, 0], sizes = [8, 16], strides = [1, 1]} : vector<16x16xf32> to vector<8x16xf32>
    %117 = vector.extract_strided_slice %15 {offsets = [8, 0], sizes = [8, 16], strides = [1, 1]} : vector<16x16xf32> to vector<8x16xf32>
    %cst_35 = arith.constant 0.000000e+00 : f32
    %118 = vector.broadcast %cst_35 : f32 to vector<8x32xf32>
    %119 = vector.extract_strided_slice %115 {offsets = [0, 0], sizes = [8, 8], strides = [1, 1]} : vector<8x32xf32> to vector<8x8xf32>
    %120 = vector.extract_strided_slice %116 {offsets = [0, 0], sizes = [8, 8], strides = [1, 1]} : vector<8x16xf32> to vector<8x8xf32>
    %121 = vector.extract_strided_slice %117 {offsets = [0, 0], sizes = [8, 8], strides = [1, 1]} : vector<8x16xf32> to vector<8x8xf32>
    %cst_36 = arith.constant dense<0.000000e+00> : vector<8x8xf32>
    %122 = tpu.matmul %119, %120, %cst_36 {dimension_numbers = #tpu.dot_dimension_numbers<[1], [1], [0], [0], [0, 0, 1, 0], [], []>} : vector<8x8xf32>, vector<8x8xf32>, vector<8x8xf32> -> vector<8x8xf32>
    %123 = arith.addf %122, %33 : vector<8x8xf32>
    %cst_37 = arith.constant dense<0xFF800000> : vector<8xf32>
    %124 = vector.multi_reduction <maximumf>, %123, %cst_37 [1] : vector<8x8xf32> to vector<8xf32>
    %125 = vector.shape_cast %124 : vector<8xf32> to vector<8x1xf32>
    %126 = vector.broadcast %125 : vector<8x1xf32> to vector<8x8xf32>
    %127 = arith.subf %123, %126 : vector<8x8xf32>
    %128 = math.exp %127 : vector<8x8xf32>
    %cst_38 = arith.constant dense<0.000000e+00> : vector<8xf32>
    %129 = vector.multi_reduction <add>, %128, %cst_38 [1] : vector<8x8xf32> to vector<8xf32>
    %130 = vector.shape_cast %129 : vector<8xf32> to vector<8x1xf32>
    %131 = tpu.reciprocal %130 {approx = true} : vector<8x1xf32> -> vector<8x1xf32>
    %132 = vector.broadcast %131 : vector<8x1xf32> to vector<8x8xf32>
    %133 = arith.mulf %128, %132 : vector<8x8xf32>
    %cst_39 = arith.constant dense<0.000000e+00> : vector<8x8xf32>
    %134 = tpu.matmul %133, %121, %cst_39 {dimension_numbers = #tpu.dot_dimension_numbers<[1], [0], [0], [1], [0, 0, 1, 1], [], []>} : vector<8x8xf32>, vector<8x8xf32>, vector<8x8xf32> -> vector<8x8xf32>
    %135 = vector.extract_strided_slice %34 {offsets = [0, 0], sizes = [8, 32], strides = [1, 1]} : vector<32x32xf32> to vector<8x32xf32>
    %cst_40 = arith.constant dense<0.000000e+00> : vector<8x32xf32>
    %136 = tpu.matmul %134, %135, %cst_40 {dimension_numbers = #tpu.dot_dimension_numbers<[1], [0], [0], [1], [0, 0, 1, 1], [], []>} : vector<8x8xf32>, vector<8x32xf32>, vector<8x32xf32> -> vector<8x32xf32>
    %137 = arith.addf %118, %136 : vector<8x32xf32>
    %138 = vector.extract_strided_slice %115 {offsets = [0, 8], sizes = [8, 8], strides = [1, 1]} : vector<8x32xf32> to vector<8x8xf32>
    %139 = vector.extract_strided_slice %116 {offsets = [0, 0], sizes = [8, 8], strides = [1, 1]} : vector<8x16xf32> to vector<8x8xf32>
    %140 = vector.extract_strided_slice %117 {offsets = [0, 0], sizes = [8, 8], strides = [1, 1]} : vector<8x16xf32> to vector<8x8xf32>
    %cst_41 = arith.constant dense<0.000000e+00> : vector<8x8xf32>
    %141 = tpu.matmul %138, %139, %cst_41 {dimension_numbers = #tpu.dot_dimension_numbers<[1], [1], [0], [0], [0, 0, 1, 0], [], []>} : vector<8x8xf32>, vector<8x8xf32>, vector<8x8xf32> -> vector<8x8xf32>
    %142 = arith.addf %141, %33 : vector<8x8xf32>
    %cst_42 = arith.constant dense<0xFF800000> : vector<8xf32>
    %143 = vector.multi_reduction <maximumf>, %142, %cst_42 [1] : vector<8x8xf32> to vector<8xf32>
    %144 = vector.shape_cast %143 : vector<8xf32> to vector<8x1xf32>
    %145 = vector.broadcast %144 : vector<8x1xf32> to vector<8x8xf32>
    %146 = arith.subf %142, %145 : vector<8x8xf32>
    %147 = math.exp %146 : vector<8x8xf32>
    %cst_43 = arith.constant dense<0.000000e+00> : vector<8xf32>
    %148 = vector.multi_reduction <add>, %147, %cst_43 [1] : vector<8x8xf32> to vector<8xf32>
    %149 = vector.shape_cast %148 : vector<8xf32> to vector<8x1xf32>
    %150 = tpu.reciprocal %149 {approx = true} : vector<8x1xf32> -> vector<8x1xf32>
    %151 = vector.broadcast %150 : vector<8x1xf32> to vector<8x8xf32>
    %152 = arith.mulf %147, %151 : vector<8x8xf32>
    %cst_44 = arith.constant dense<0.000000e+00> : vector<8x8xf32>
    %153 = tpu.matmul %152, %140, %cst_44 {dimension_numbers = #tpu.dot_dimension_numbers<[1], [0], [0], [1], [0, 0, 1, 1], [], []>} : vector<8x8xf32>, vector<8x8xf32>, vector<8x8xf32> -> vector<8x8xf32>
    %154 = vector.extract_strided_slice %34 {offsets = [8, 0], sizes = [8, 32], strides = [1, 1]} : vector<32x32xf32> to vector<8x32xf32>
    %cst_45 = arith.constant dense<0.000000e+00> : vector<8x32xf32>
    %155 = tpu.matmul %153, %154, %cst_45 {dimension_numbers = #tpu.dot_dimension_numbers<[1], [0], [0], [1], [0, 0, 1, 1], [], []>} : vector<8x8xf32>, vector<8x32xf32>, vector<8x32xf32> -> vector<8x32xf32>
    %156 = arith.addf %137, %155 : vector<8x32xf32>
    %157 = vector.extract_strided_slice %115 {offsets = [0, 16], sizes = [8, 8], strides = [1, 1]} : vector<8x32xf32> to vector<8x8xf32>
    %158 = vector.extract_strided_slice %116 {offsets = [0, 8], sizes = [8, 8], strides = [1, 1]} : vector<8x16xf32> to vector<8x8xf32>
    %159 = vector.extract_strided_slice %117 {offsets = [0, 8], sizes = [8, 8], strides = [1, 1]} : vector<8x16xf32> to vector<8x8xf32>
    %cst_46 = arith.constant dense<0.000000e+00> : vector<8x8xf32>
    %160 = tpu.matmul %157, %158, %cst_46 {dimension_numbers = #tpu.dot_dimension_numbers<[1], [1], [0], [0], [0, 0, 1, 0], [], []>} : vector<8x8xf32>, vector<8x8xf32>, vector<8x8xf32> -> vector<8x8xf32>
    %161 = arith.addf %160, %33 : vector<8x8xf32>
    %cst_47 = arith.constant dense<0xFF800000> : vector<8xf32>
    %162 = vector.multi_reduction <maximumf>, %161, %cst_47 [1] : vector<8x8xf32> to vector<8xf32>
    %163 = vector.shape_cast %162 : vector<8xf32> to vector<8x1xf32>
    %164 = vector.broadcast %163 : vector<8x1xf32> to vector<8x8xf32>
    %165 = arith.subf %161, %164 : vector<8x8xf32>
    %166 = math.exp %165 : vector<8x8xf32>
    %cst_48 = arith.constant dense<0.000000e+00> : vector<8xf32>
    %167 = vector.multi_reduction <add>, %166, %cst_48 [1] : vector<8x8xf32> to vector<8xf32>
    %168 = vector.shape_cast %167 : vector<8xf32> to vector<8x1xf32>
    %169 = tpu.reciprocal %168 {approx = true} : vector<8x1xf32> -> vector<8x1xf32>
    %170 = vector.broadcast %169 : vector<8x1xf32> to vector<8x8xf32>
    %171 = arith.mulf %166, %170 : vector<8x8xf32>
    %cst_49 = arith.constant dense<0.000000e+00> : vector<8x8xf32>
    %172 = tpu.matmul %171, %159, %cst_49 {dimension_numbers = #tpu.dot_dimension_numbers<[1], [0], [0], [1], [0, 0, 1, 1], [], []>} : vector<8x8xf32>, vector<8x8xf32>, vector<8x8xf32> -> vector<8x8xf32>
    %173 = vector.extract_strided_slice %34 {offsets = [16, 0], sizes = [8, 32], strides = [1, 1]} : vector<32x32xf32> to vector<8x32xf32>
    %cst_50 = arith.constant dense<0.000000e+00> : vector<8x32xf32>
    %174 = tpu.matmul %172, %173, %cst_50 {dimension_numbers = #tpu.dot_dimension_numbers<[1], [0], [0], [1], [0, 0, 1, 1], [], []>} : vector<8x8xf32>, vector<8x32xf32>, vector<8x32xf32> -> vector<8x32xf32>
    %175 = arith.addf %156, %174 : vector<8x32xf32>
    %176 = vector.extract_strided_slice %115 {offsets = [0, 24], sizes = [8, 8], strides = [1, 1]} : vector<8x32xf32> to vector<8x8xf32>
    %177 = vector.extract_strided_slice %116 {offsets = [0, 8], sizes = [8, 8], strides = [1, 1]} : vector<8x16xf32> to vector<8x8xf32>
    %178 = vector.extract_strided_slice %117 {offsets = [0, 8], sizes = [8, 8], strides = [1, 1]} : vector<8x16xf32> to vector<8x8xf32>
    %cst_51 = arith.constant dense<0.000000e+00> : vector<8x8xf32>
    %179 = tpu.matmul %176, %177, %cst_51 {dimension_numbers = #tpu.dot_dimension_numbers<[1], [1], [0], [0], [0, 0, 1, 0], [], []>} : vector<8x8xf32>, vector<8x8xf32>, vector<8x8xf32> -> vector<8x8xf32>
    %180 = arith.addf %179, %33 : vector<8x8xf32>
    %cst_52 = arith.constant dense<0xFF800000> : vector<8xf32>
    %181 = vector.multi_reduction <maximumf>, %180, %cst_52 [1] : vector<8x8xf32> to vector<8xf32>
    %182 = vector.shape_cast %181 : vector<8xf32> to vector<8x1xf32>
    %183 = vector.broadcast %182 : vector<8x1xf32> to vector<8x8xf32>
    %184 = arith.subf %180, %183 : vector<8x8xf32>
    %185 = math.exp %184 : vector<8x8xf32>
    %cst_53 = arith.constant dense<0.000000e+00> : vector<8xf32>
    %186 = vector.multi_reduction <add>, %185, %cst_53 [1] : vector<8x8xf32> to vector<8xf32>
    %187 = vector.shape_cast %186 : vector<8xf32> to vector<8x1xf32>
    %188 = tpu.reciprocal %187 {approx = true} : vector<8x1xf32> -> vector<8x1xf32>
    %189 = vector.broadcast %188 : vector<8x1xf32> to vector<8x8xf32>
    %190 = arith.mulf %185, %189 : vector<8x8xf32>
    %cst_54 = arith.constant dense<0.000000e+00> : vector<8x8xf32>
    %191 = tpu.matmul %190, %178, %cst_54 {dimension_numbers = #tpu.dot_dimension_numbers<[1], [0], [0], [1], [0, 0, 1, 1], [], []>} : vector<8x8xf32>, vector<8x8xf32>, vector<8x8xf32> -> vector<8x8xf32>
    %192 = vector.extract_strided_slice %34 {offsets = [24, 0], sizes = [8, 32], strides = [1, 1]} : vector<32x32xf32> to vector<8x32xf32>
    %cst_55 = arith.constant dense<0.000000e+00> : vector<8x32xf32>
    %193 = tpu.matmul %191, %192, %cst_55 {dimension_numbers = #tpu.dot_dimension_numbers<[1], [0], [0], [1], [0, 0, 1, 1], [], []>} : vector<8x8xf32>, vector<8x32xf32>, vector<8x32xf32> -> vector<8x32xf32>
    %194 = arith.addf %175, %193 : vector<8x32xf32>
    %195 = tpu.concatenate %114, %194 in 0 : vector<8x32xf32>, vector<8x32xf32> -> vector<16x32xf32>
    %196 = arith.addf %0, %195 : vector<16x32xf32>
    %197 = arith.mulf %196, %196 : vector<16x32xf32>
    %cst_56 = arith.constant dense<0.000000e+00> : vector<16xf32>
    %198 = vector.multi_reduction <add>, %197, %cst_56 [1] : vector<16x32xf32> to vector<16xf32>
    %199 = vector.shape_cast %198 : vector<16xf32> to vector<16x1xf32>
    %cst_57 = arith.constant 3.200000e+01 : f32
    %200 = vector.broadcast %cst_57 : f32 to vector<16x1xf32>
    %201 = arith.divf %199, %200 : vector<16x1xf32>
    %cst_58 = arith.constant 9.99999997E-7 : f32
    %202 = vector.broadcast %cst_58 : f32 to vector<16x1xf32>
    %203 = arith.addf %201, %202 : vector<16x1xf32>
    %204 = math.rsqrt %203 : vector<16x1xf32>
    %205 = vector.broadcast %204 : vector<16x1xf32> to vector<16x32xf32>
    %206 = arith.mulf %196, %205 : vector<16x32xf32>
    %c0_59 = arith.constant 0 : index
    %c0_60 = arith.constant 0 : index
    %207 = vector.load %arg5[%c0_59, %c0_60] : memref<32x128xf32, #tpu.memory_space<vmem>>, vector<32x128xf32>
    %cst_61 = arith.constant dense<0.000000e+00> : vector<16x128xf32>
    %208 = tpu.matmul %206, %207, %cst_61 {dimension_numbers = #tpu.dot_dimension_numbers<[1], [0], [0], [1], [0, 0, 1, 1], [], []>} : vector<16x32xf32>, vector<32x128xf32>, vector<16x128xf32> -> vector<16x128xf32>
    %209 = vector.extract_strided_slice %208 {offsets = [0, 0], sizes = [16, 64], strides = [1, 1]} : vector<16x128xf32> to vector<16x64xf32>
    %210 = vector.extract_strided_slice %208 {offsets = [0, 64], sizes = [16, 64], strides = [1, 1]} : vector<16x128xf32> to vector<16x64xf32>
    %211 = arith.negf %209 : vector<16x64xf32>
    %212 = math.exp %211 : vector<16x64xf32>
    %cst_62 = arith.constant 1.000000e+00 : f32
    %213 = vector.broadcast %cst_62 : f32 to vector<16x64xf32>
    %214 = arith.addf %213, %212 : vector<16x64xf32>
    %215 = arith.divf %213, %214 : vector<16x64xf32>
    %216 = arith.mulf %209, %215 : vector<16x64xf32>
    %217 = arith.mulf %216, %210 : vector<16x64xf32>
    %c0_63 = arith.constant 0 : index
    %c0_64 = arith.constant 0 : index
    %218 = vector.load %arg6[%c0_63, %c0_64] : memref<64x32xf32, #tpu.memory_space<vmem>>, vector<64x32xf32>
    %cst_65 = arith.constant dense<0.000000e+00> : vector<16x32xf32>
    %219 = tpu.matmul %217, %218, %cst_65 {dimension_numbers = #tpu.dot_dimension_numbers<[1], [0], [0], [1], [0, 0, 1, 1], [], []>} : vector<16x64xf32>, vector<64x32xf32>, vector<16x32xf32> -> vector<16x32xf32>
    %220 = arith.addf %196, %219 : vector<16x32xf32>
    %c0_66 = arith.constant 0 : index
    %c0_67 = arith.constant 0 : index
    %221 = vector.load %arg7[%c0_66, %c0_67] : memref<16x32xf32, #tpu.memory_space<vmem>>, vector<16x32xf32>
    tpu.vector_store %arg7[%c0_66, %c0_67], %220 {strides = array<i32>} : memref<16x32xf32, #tpu.memory_space<vmem>>, vector<16x32xf32>,
    return
  }
}

</mosaic_0001>

<llo_original>
// kernel: tpu_custom_call.1
$region0: #{tpu_custom_call.1}
  #allocation0 [shape = 'u32[]', space=smem, size = 0x4, offset = 0x4, fixed_abs, tag = 'smem constant byte address 0x4 - core index']
  #allocation1 [shape = 'u32[144,128]{1,0:T(1,128)}', space=vmem, size = 0x12000, scoped, tag = 'internal scratch']
  %s0 = inlined_call_operand.hbm [shape: f32[16,32], index: 0, kind: input, shape index: {}]
  %s1 = inlined_call_operand.hbm [shape: f32[16,32], index: 1, kind: input, shape index: {}]
  %s2 = inlined_call_operand.hbm [shape: f32[16,32], index: 2, kind: input, shape index: {}]
  %s3 = inlined_call_operand.vmem [shape: f32[32,112], index: 3, kind: input, shape index: {}]
  %s4 = inlined_call_operand.vmem [shape: f32[32,32], index: 4, kind: input, shape index: {}]
  %s5 = inlined_call_operand.vmem [shape: f32[32,128], index: 5, kind: input, shape index: {}]
  %s6 = inlined_call_operand.vmem [shape: f32[64,32], index: 6, kind: input, shape index: {}]
  %s7 = inlined_call_operand.hbm [shape: f32[16,32], index: 7, kind: output, shape index: {}]
  %s8 = sld [smem:[#allocation0]]
  $region50: #{tpu_custom_call.1} parent=0
    _
  %s10 = ssub.s32 1, %s8
  %s11 = scalar_select 0, %s10, %s8
  $region1: #{tpu_custom_call.1} parent=0
    #allocation2 [shape = 'u8[8192]{0}', space=vmem, size = 0x2000, scoped, tag = 'input window, operand 0, single buffered']
    #allocation3 [shape = 's32[1]{0}', space=sflag, size = 0x4, scoped, tag = 'scoped memory for tpu_custom_call.1']
    #allocation4 [shape = 's32[1]{0}', space=sflag, size = 0x4, scoped, tag = 'scoped memory for tpu_custom_call.1']
    #allocation5 [shape = 'u8[8192]{0}', space=vmem, size = 0x2000, scoped, tag = 'input window, operand 1, single buffered']
    #allocation6 [shape = 's32[1]{0}', space=sflag, size = 0x4, scoped, tag = 'scoped memory for tpu_custom_call.1']
    #allocation7 [shape = 'u8[8192]{0}', space=vmem, size = 0x2000, scoped, tag = 'input window, operand 2, single buffered']
    #allocation8 [shape = 'u8[8192]{0}', space=vmem, size = 0x2000, scoped, tag = 'output window, operand 0, single buffered']
    %12 = vsyncpa [#allocation3], 0
    %13 = vsyncpa [#allocation6], 0
    %14 = vsyncpa [#allocation4], 0
    // Predicated region
    $region2: #{tpu_custom_call.1} parent=1 // pred_check
      _
    $region3: #{tpu_custom_call.1} parent=1 // pred_check_branch
      %16 = sbr.rel (0) target = $region5
    $region4: #{tpu_custom_call.1} parent=1 // pred_region
      %s18 = ssub.s32 256, 256
      %19 = vsyncadd [#allocation3], %s18
      %s20 = sshll.u32 [#allocation2], 4
      %s21 = int_to_ptr.vmem [resolvable:$true] %s20
      %26 = dma.hbm_to_vmem [thread:$0]  %s0, 256, %s21, [#allocation3], 128, 128, 8
    $region5: #{tpu_custom_call.1} parent=1 // pred_fallthru
      _
    // Predicated region
    $region6: #{tpu_custom_call.1} parent=1 // pred_check
      _
    $region7: #{tpu_custom_call.1} parent=1 // pred_check_branch
      %28 = sbr.rel (0) target = $region9
    $region8: #{tpu_custom_call.1} parent=1 // pred_region
      %s30 = ssub.s32 256, 256
      %31 = vsyncadd [#allocation6], %s30
      %s32 = sshll.u32 [#allocation5], 4
      %s33 = int_to_ptr.vmem [resolvable:$true] %s32
      %38 = dma.hbm_to_vmem [thread:$0]  %s1, 256, %s33, [#allocation6], 128, 128, 8
    $region9: #{tpu_custom_call.1} parent=1 // pred_fallthru
      _
    // Predicated region
    $region10: #{tpu_custom_call.1} parent=1 // pred_check
      _
    $region11: #{tpu_custom_call.1} parent=1 // pred_check_branch
      %40 = sbr.rel (0) target = $region13
    $region12: #{tpu_custom_call.1} parent=1 // pred_region
      %s42 = ssub.s32 256, 256
      %43 = vsyncadd [#allocation6], %s42
      %s44 = sshll.u32 [#allocation7], 4
      %s45 = int_to_ptr.vmem [resolvable:$true] %s44
      %50 = dma.hbm_to_vmem [thread:$0]  %s2, 256, %s45, [#allocation6], 128, 128, 8
    $region13: #{tpu_custom_call.1} parent=1 // pred_fallthru
      _
    // Predicated region
    $region14: #{tpu_custom_call.1} parent=1 // pred_check
      _
    $region15: #{tpu_custom_call.1} parent=1 // pred_check_branch
      %52 = sbr.rel (0) target = $region17
    $region16: #{tpu_custom_call.1} parent=1 // pred_region
      _
    $region17: #{tpu_custom_call.1} parent=1 // pred_fallthru
      _
    // Predicated region
    $region18: #{tpu_custom_call.1} parent=1 // pred_check
      _
    $region19: #{tpu_custom_call.1} parent=1 // pred_check_branch
      %54 = sbr.rel (0) target = $region21
    $region20: #{tpu_custom_call.1} parent=1 // pred_region
      _
    $region21: #{tpu_custom_call.1} parent=1 // pred_fallthru
      _
    // Predicated region
    $region22: #{tpu_custom_call.1} parent=1 // pred_check
      _
    $region23: #{tpu_custom_call.1} parent=1 // pred_check_branch
      %56 = sbr.rel (0) target = $region25
    $region24: #{tpu_custom_call.1} parent=1 // pred_region
      _
    $region25: #{tpu_custom_call.1} parent=1 // pred_fallthru
      _
    // Predicated region
    $region26: #{tpu_custom_call.1} parent=1 // pred_check
      _
    $region27: #{tpu_custom_call.1} parent=1 // pred_check_branch
      %58 = sbr.rel (0) target = $region29
    $region28: #{tpu_custom_call.1} parent=1 // pred_region
      _
    $region29: #{tpu_custom_call.1} parent=1 // pred_fallthru
      _
    // Predicated region
    $region30: #{tpu_custom_call.1} parent=1 // pred_check
      _
    $region31: #{tpu_custom_call.1} parent=1 // pred_check_branch
      %60 = sbr.rel (0) target = $region33
    $region32: #{tpu_custom_call.1} parent=1 // pred_region
      %61 = dma.done [#allocation3], 256
    $region33: #{tpu_custom_call.1} parent=1 // pred_fallthru
      _
    // Predicated region
    $region34: #{tpu_custom_call.1} parent=1 // pred_check
      _
    $region35: #{tpu_custom_call.1} parent=1 // pred_check_branch
      %63 = sbr.rel (0) target = $region37
    $region36: #{tpu_custom_call.1} parent=1 // pred_region
      %64 = dma.done [#allocation6], 256
    $region37: #{tpu_custom_call.1} parent=1 // pred_fallthru
      _
    // Predicated region
    $region38: #{tpu_custom_call.1} parent=1 // pred_check
      _
    $region39: #{tpu_custom_call.1} parent=1 // pred_check_branch
      %66 = sbr.rel (0) target = $region41
    $region40: #{tpu_custom_call.1} parent=1 // pred_region
      %67 = dma.done [#allocation6], 256
    $region41: #{tpu_custom_call.1} parent=1 // pred_fallthru
      _
    %v68 = vld [vmem:[#allocation2] sm:$0xff]
    %v69 = vld [vmem:[#allocation2 + $0x8] sm:$0xff]
    %v70 = vmul.f32 %v68, %v68
    %v71 = vmul.f32 %v69, %v69
    %vm72 = vcmask 261120
    %v73 = vsel %vm72, %v70, 0.0
    %74 = vadd.xlane.f32.xlu0 %v73
    %v75 = vpop.xlane.xlu0 %74
    %v76 = vsel %vm72, %v71, 0.0
    %77 = vadd.xlane.f32.xlu0 %v76
    %v78 = vpop.xlane.xlu0 %77
    %v79 = vrcp.pop 32.0
    %v80 = vmul.f32 %v75, %v79
    %v81 = vmul.f32 %v78, %v79
    %v82 = vadd.f32 %v80, 1e-06
    %v83 = vadd.f32 %v81, 1e-06
    %v84 = vrsqrt.pop %v82
    %v85 = vrsqrt.pop %v83
    %v86 = vmul.f32 %v68, %v84
    %v87 = vmul.f32 %v69, %v85
    %v88 = vld [vmem:[%s3] sm:$0xff]
    %v89 = vld [vmem:[%s3 + $0x8] sm:$0xff]
    %v90 = vld [vmem:[%s3 + $0x10] sm:$0xff]
    %v91 = vld [vmem:[%s3 + $0x18] sm:$0xff]
    %v93 = vsel %vm72, %v86, 0
    %v96 = vsel %vm72, %v87, 0
    %98 = vmatprep.subr.mxu0 0.0
    %99 = vmatpush1.msra.mxu0 0.0
    %100 = vmatprep.subr.mxu0 0.0
    %101 = vmatpush1.msra.mxu0 0.0
    %102 = vmatprep.subr.mxu0 0.0
    %103 = vmatpush1.msra.mxu0 0.0
    %104 = vmatprep.subr.mxu0 0.0
    %105 = vmatpush1.msra.mxu0 0.0
    %106 = vmatprep.subr.mxu0 0.0
    %107 = vmatpush1.msra.mxu0 0.0
    %108 = vmatprep.subr.mxu0 0.0
    %109 = vmatpush1.msra.mxu0 0.0
    %110 = vmatprep.subr.mxu0 0.0
    %111 = vmatpush1.msra.mxu0 0.0
    %112 = vmatprep.subr.mxu0 0.0
    %113 = vmatpush1.msra.mxu0 0.0
    %114 = vmatprep.subr.mxu0 0.0
    %115 = vmatpush1.msra.mxu0 0.0
    %116 = vmatprep.subr.mxu0 0.0
    %117 = vmatpush1.msra.mxu0 0.0
    %118 = vmatprep.subr.mxu0 0.0
    %119 = vmatpush1.msra.mxu0 0.0
    %120 = vmatprep.subr.mxu0 0.0
    %121 = vmatpush1.msra.mxu0 0.0
    %122 = vmatprep.subr.mxu0 0.0
    %123 = vmatpush1.msra.mxu0 %v91
    %124 = vmatprep.subr.mxu0 0.0
    %125 = vmatpush1.msra.mxu0 %v90
    %126 = vmatprep.subr.mxu0 0.0
    %127 = vmatpush1.msra.mxu0 %v89
    %128 = vmatprep.subr.mxu0 0.0
    %129 = vmatpush1.msra.mxu0 %v88
    %130 = vmatprep.subr.mxu0 0.0
    %131 = vmatpush2.msra.mxu0 0.0
    %132 = vmatprep.subr.mxu0 0.0
    %133 = vmatpush2.msra.mxu0 0.0
    %134 = vmatprep.subr.mxu0 0.0
    %135 = vmatpush2.msra.mxu0 0.0
    %136 = vmatprep.subr.mxu0 0.0
    %137 = vmatpush2.msra.mxu0 0.0
    %138 = vmatprep.subr.mxu0 0.0
    %139 = vmatpush2.msra.mxu0 0.0
    %140 = vmatprep.subr.mxu0 0.0
    %141 = vmatpush2.msra.mxu0 0.0
    %142 = vmatprep.subr.mxu0 0.0
    %143 = vmatpush2.msra.mxu0 0.0
    %144 = vmatprep.subr.mxu0 0.0
    %145 = vmatpush2.msra.mxu0 0.0
    %146 = vmatprep.subr.mxu0 0.0
    %147 = vmatpush2.msra.mxu0 0.0
    %148 = vmatprep.subr.mxu0 0.0
    %149 = vmatpush2.msra.mxu0 0.0
    %150 = vmatprep.subr.mxu0 0.0
    %151 = vmatpush2.msra.mxu0 0.0
    %152 = vmatprep.subr.mxu0 0.0
    %153 = vmatpush2.msra.mxu0 0.0
    %154 = vmatprep.subr.mxu0 0.0
    %155 = vmatpush2.msra.mxu0 0.0
    %156 = vmatprep.subr.mxu0 0.0
    %157 = vmatpush2.msra.mxu0 0.0
    %158 = vmatprep.subr.mxu0 0.0
    %159 = vmatpush2.msra.mxu0 0.0
    %160 = vmatprep.subr.mxu0 0.0
    %161 = vmatpush2.msra.mxu0 0.0
    %162 = vmatprep.mubr.f32.mxu0 0.0
    %163 = vmatmul.mubr.f32.gmra.mxu0 %v93
    %v164 = vpop.f32.mrf.mxu0
    %v165 = vadd.f32 0.0, %v164
    %v166 = vpop.f32.mrf.mxu0
    %167 = vmatprep.mubr.f32.mxu0 0.0
    %168 = vmatmul.mubr.f32.gmra.mxu0 %v96
    %v169 = vpop.f32.mrf.mxu0
    %v170 = vadd.f32 0.0, %v169
    %v171 = vpop.f32.mrf.mxu0
    %172 = vdwg.mxu0
    %v173 = vld [vmem:[#allocation5] sm:$0xff]
    %v174 = vld [vmem:[#allocation5 + $0x8] sm:$0xff]
    %v175 = vld [vmem:[#allocation7] sm:$0xff]
    %v176 = vld [vmem:[#allocation7 + $0x8] sm:$0xff]
    %v177 = vmul.f32 %v165, %v173
    %v178 = vmul.f32 %v170, %v174
    %181 = vrot.lane.b32.xlu0 %v175, 64
    %v182 = vpop.permute.xlu0 %181
    %183 = vrot.lane.b32.xlu0 %v176, 64
    %v184 = vpop.permute.xlu0 %183
    %v187 = vmul.f32 %v165, %v182
    %v188 = vmul.f32 %v170, %v184
    %191 = vrot.lane.b32.xlu0 %v187, 64
    %v192 = vpop.permute.xlu0 %191
    %193 = vrot.lane.b32.xlu0 %v188, 64
    %v194 = vpop.permute.xlu0 %193
    %v197 = vadd.f32 %v177, %v192
    %v198 = vadd.f32 %v178, %v194
    %201 = vrot.lane.b32.xlu0 %v173, 32
    %v202 = vpop.permute.xlu0 %201
    %203 = vrot.lane.b32.xlu0 %v174, 32
    %v204 = vpop.permute.xlu0 %203
    %v207 = vmul.f32 %v165, %v202
    %v208 = vmul.f32 %v170, %v204
    %209 = vrot.lane.b32.xlu0 %v175, 96
    %v210 = vpop.permute.xlu0 %209
    %211 = vrot.lane.b32.xlu0 %v176, 96
    %v212 = vpop.permute.xlu0 %211
    %v215 = vmul.f32 %v165, %v210
    %v216 = vmul.f32 %v170, %v212
    %219 = vrot.lane.b32.xlu0 %v215, 64
    %v220 = vpop.permute.xlu0 %219
    %221 = vrot.lane.b32.xlu0 %v216, 64
    %v222 = vpop.permute.xlu0 %221
    %v225 = vadd.f32 %v207, %v220
    %v226 = vadd.f32 %v208, %v222
    %v227 = vlaneseq
    %v228 = vshrl.u32 %v227, 7
    %v229 = vlaneseq
    %v230 = vand.u32 %v229, 127
    %vm231 = vcmp.le.s32.totalorder %v230, %v228
    %v232 = vsel %vm231, 0.0, -3.4028235e+38
    %v233 = vld [vmem:[%s4] sm:$0xff]
    %v234 = vld [vmem:[%s4 + $0x8] sm:$0xff]
    %v235 = vld [vmem:[%s4 + $0x10] sm:$0xff]
    %v236 = vld [vmem:[%s4 + $0x18] sm:$0xff]
    %238 = vrot.lane.b32.xlu0 %v225, 96
    %v239 = vpop.permute.xlu0 %238
    %vm240 = vcmask 64512
    %v242 = vsel %vm240, %v197, 0
    %v244 = vsel %vm240, %v239, 0
    %246 = vmatprep.subr.mxu0 0.0
    %247 = vmatpush1.xpose.msra.mxu0 0.0
    %248 = vmatprep.subr.mxu0 0.0
    %249 = vmatpush1.xpose.msra.mxu0 0.0
    %250 = vmatprep.subr.mxu0 0.0
    %251 = vmatpush1.xpose.msra.mxu0 0.0
    %252 = vmatprep.subr.mxu0 0.0
    %253 = vmatpush1.xpose.msra.mxu0 0.0
    %254 = vmatprep.subr.mxu0 0.0
    %255 = vmatpush1.xpose.msra.mxu0 0.0
    %256 = vmatprep.subr.mxu0 0.0
    %257 = vmatpush1.xpose.msra.mxu0 0.0
    %258 = vmatprep.subr.mxu0 0.0
    %259 = vmatpush1.xpose.msra.mxu0 0.0
    %260 = vmatprep.subr.mxu0 0.0
    %261 = vmatpush1.xpose.msra.mxu0 0.0
    %262 = vmatprep.subr.mxu0 0.0
    %263 = vmatpush1.xpose.msra.mxu0 0.0
    %264 = vmatprep.subr.mxu0 0.0
    %265 = vmatpush1.xpose.msra.mxu0 0.0
    %266 = vmatprep.subr.mxu0 0.0
    %267 = vmatpush1.xpose.msra.mxu0 0.0
    %268 = vmatprep.subr.mxu0 0.0
    %269 = vmatpush1.xpose.msra.mxu0 0.0
    %270 = vmatprep.subr.mxu0 0.0
    %271 = vmatpush1.xpose.msra.mxu0 0.0
    %272 = vmatprep.subr.mxu0 0.0
    %273 = vmatpush1.xpose.msra.mxu0 0.0
    %274 = vmatprep.subr.mxu0 0.0
    %275 = vmatpush1.xpose.msra.mxu0 0.0
    %276 = vmatprep.subr.mxu0 0.0
    %277 = vmatpush1.xpose.msra.mxu0 %v244
    %278 = vmatprep.subr.mxu0 0.0
    %279 = vmatpush2.xpose.msra.mxu0 0.0
    %280 = vmatprep.subr.mxu0 0.0
    %281 = vmatpush2.xpose.msra.mxu0 0.0
    %282 = vmatprep.subr.mxu0 0.0
    %283 = vmatpush2.xpose.msra.mxu0 0.0
    %284 = vmatprep.subr.mxu0 0.0
    %285 = vmatpush2.xpose.msra.mxu0 0.0
    %286 = vmatprep.subr.mxu0 0.0
    %287 = vmatpush2.xpose.msra.mxu0 0.0
    %288 = vmatprep.subr.mxu0 0.0
    %289 = vmatpush2.xpose.msra.mxu0 0.0
    %290 = vmatprep.subr.mxu0 0.0
    %291 = vmatpush2.xpose.msra.mxu0 0.0
    %292 = vmatprep.subr.mxu0 0.0
    %293 = vmatpush2.xpose.msra.mxu0 0.0
    %294 = vmatprep.subr.mxu0 0.0
    %295 = vmatpush2.xpose.msra.mxu0 0.0
    %296 = vmatprep.subr.mxu0 0.0
    %297 = vmatpush2.xpose.msra.mxu0 0.0
    %298 = vmatprep.subr.mxu0 0.0
    %299 = vmatpush2.xpose.msra.mxu0 0.0
    %300 = vmatprep.subr.mxu0 0.0
    %301 = vmatpush2.xpose.msra.mxu0 0.0
    %302 = vmatprep.subr.mxu0 0.0
    %303 = vmatpush2.xpose.msra.mxu0 0.0
    %304 = vmatprep.subr.mxu0 0.0
    %305 = vmatpush2.xpose.msra.mxu0 0.0
    %306 = vmatprep.subr.mxu0 0.0
    %307 = vmatpush2.xpose.msra.mxu0 0.0
    %308 = vmatprep.subr.mxu0 0.0
    %309 = vmatpush2.xpose.msra.mxu0 0.0
    %310 = vmatprep.mubr.f32.mxu0 0.0
    %311 = vmatmul.mubr.f32.gmra.mxu0 %v242
    %v312 = vpop.f32.mrf.mxu0
    %v313 = vadd.f32 %v232, %v312
    %v314 = vpop.f32.mrf.mxu0
    %315 = vdwg.mxu0
    %v316 = vsel %vm240, %v313, -inf
    %317 = vmax.xlane.f32.xlu0 %v316
    %v318 = vpop.xlane.xlu0 %317
    %v319 = vsub.f32 %v313, %v318
    %v320 = vmul.f32 %v319, 1.442695
    %v321 = vpow.pop %v320
    %v322 = vsel %vm240, %v321, 0.0
    %323 = vadd.xlane.f32.xlu0 %v322
    %v324 = vpop.xlane.xlu0 %323
    %v325 = vrcp.pop %v324
    %v326 = vmul.f32 %v321, %v325
    %328 = vrot.lane.b32.xlu0 %v165, 80
    %v329 = vpop.permute.xlu0 %328
    %v332 = vsel %vm240, %v326, 0
    %334 = vmatprep.subr.mxu0 0.0
    %335 = vmatpush1.msra.mxu0 0.0
    %336 = vmatprep.subr.mxu0 0.0
    %337 = vmatpush1.msra.mxu0 0.0
    %338 = vmatprep.subr.mxu0 0.0
    %339 = vmatpush1.msra.mxu0 0.0
    %340 = vmatprep.subr.mxu0 0.0
    %341 = vmatpush1.msra.mxu0 0.0
    %342 = vmatprep.subr.mxu0 0.0
    %343 = vmatpush1.msra.mxu0 0.0
    %344 = vmatprep.subr.mxu0 0.0
    %345 = vmatpush1.msra.mxu0 0.0
    %346 = vmatprep.subr.mxu0 0.0
    %347 = vmatpush1.msra.mxu0 0.0
    %348 = vmatprep.subr.mxu0 0.0
    %349 = vmatpush1.msra.mxu0 0.0
    %350 = vmatprep.subr.mxu0 0.0
    %351 = vmatpush1.msra.mxu0 0.0
    %352 = vmatprep.subr.mxu0 0.0
    %353 = vmatpush1.msra.mxu0 0.0
    %354 = vmatprep.subr.mxu0 0.0
    %355 = vmatpush1.msra.mxu0 0.0
    %356 = vmatprep.subr.mxu0 0.0
    %357 = vmatpush1.msra.mxu0 0.0
    %358 = vmatprep.subr.mxu0 0.0
    %359 = vmatpush1.msra.mxu0 0.0
    %360 = vmatprep.subr.mxu0 0.0
    %361 = vmatpush1.msra.mxu0 0.0
    %362 = vmatprep.subr.mxu0 0.0
    %363 = vmatpush1.msra.mxu0 0.0
    %364 = vmatprep.subr.mxu0 0.0
    %365 = vmatpush1.msra.mxu0 %v329
    %366 = vmatprep.subr.mxu0 0.0
    %367 = vmatpush2.msra.mxu0 0.0
    %368 = vmatprep.subr.mxu0 0.0
    %369 = vmatpush2.msra.mxu0 0.0
    %370 = vmatprep.subr.mxu0 0.0
    %371 = vmatpush2.msra.mxu0 0.0
    %372 = vmatprep.subr.mxu0 0.0
    %373 = vmatpush2.msra.mxu0 0.0
    %374 = vmatprep.subr.mxu0 0.0
    %375 = vmatpush2.msra.mxu0 0.0
    %376 = vmatprep.subr.mxu0 0.0
    %377 = vmatpush2.msra.mxu0 0.0
    %378 = vmatprep.subr.mxu0 0.0
    %379 = vmatpush2.msra.mxu0 0.0
    %380 = vmatprep.subr.mxu0 0.0
    %381 = vmatpush2.msra.mxu0 0.0
    %382 = vmatprep.subr.mxu0 0.0
    %383 = vmatpush2.msra.mxu0 0.0
    %384 = vmatprep.subr.mxu0 0.0
    %385 = vmatpush2.msra.mxu0 0.0
    %386 = vmatprep.subr.mxu0 0.0
    %387 = vmatpush2.msra.mxu0 0.0
    %388 = vmatprep.subr.mxu0 0.0
    %389 = vmatpush2.msra.mxu0 0.0
    %390 = vmatprep.subr.mxu0 0.0
    %391 = vmatpush2.msra.mxu0 0.0
    %392 = vmatprep.subr.mxu0 0.0
    %393 = vmatpush2.msra.mxu0 0.0
    %394 = vmatprep.subr.mxu0 0.0
    %395 = vmatpush2.msra.mxu0 0.0
    %396 = vmatprep.subr.mxu0 0.0
    %397 = vmatpush2.msra.mxu0 0.0
    %398 = vmatprep.mubr.f32.mxu0 0.0
    %399 = vmatmul.mubr.f32.gmra.mxu0 %v332
    %v400 = vpop.f32.mrf.mxu0
    %v401 = vadd.f32 0.0, %v400
    %v402 = vpop.f32.mrf.mxu0
    %403 = vdwg.mxu0
    %404 = vrot.lane.b32.xlu0 %v197, 120
    %v405 = vpop.permute.xlu0 %404
    %v406 = vsel %vm240, %v405, 0
    %408 = vmatprep.subr.mxu0 0.0
    %409 = vmatpush1.xpose.msra.mxu0 0.0
    %410 = vmatprep.subr.mxu0 0.0
    %411 = vmatpush1.xpose.msra.mxu0 0.0
    %412 = vmatprep.subr.mxu0 0.0
    %413 = vmatpush1.xpose.msra.mxu0 0.0
    %414 = vmatprep.subr.mxu0 0.0
    %415 = vmatpush1.xpose.msra.mxu0 0.0
    %416 = vmatprep.subr.mxu0 0.0
    %417 = vmatpush1.xpose.msra.mxu0 0.0
    %418 = vmatprep.subr.mxu0 0.0
    %419 = vmatpush1.xpose.msra.mxu0 0.0
    %420 = vmatprep.subr.mxu0 0.0
    %421 = vmatpush1.xpose.msra.mxu0 0.0
    %422 = vmatprep.subr.mxu0 0.0
    %423 = vmatpush1.xpose.msra.mxu0 0.0
    %424 = vmatprep.subr.mxu0 0.0
    %425 = vmatpush1.xpose.msra.mxu0 0.0
    %426 = vmatprep.subr.mxu0 0.0
    %427 = vmatpush1.xpose.msra.mxu0 0.0
    %428 = vmatprep.subr.mxu0 0.0
    %429 = vmatpush1.xpose.msra.mxu0 0.0
    %430 = vmatprep.subr.mxu0 0.0
    %431 = vmatpush1.xpose.msra.mxu0 0.0
    %432 = vmatprep.subr.mxu0 0.0
    %433 = vmatpush1.xpose.msra.mxu0 0.0
    %434 = vmatprep.subr.mxu0 0.0
    %435 = vmatpush1.xpose.msra.mxu0 0.0
    %436 = vmatprep.subr.mxu0 0.0
    %437 = vmatpush1.xpose.msra.mxu0 0.0
    %438 = vmatprep.subr.mxu0 0.0
    %439 = vmatpush1.xpose.msra.mxu0 %v244
    %440 = vmatprep.subr.mxu0 0.0
    %441 = vmatpush2.xpose.msra.mxu0 0.0
    %442 = vmatprep.subr.mxu0 0.0
    %443 = vmatpush2.xpose.msra.mxu0 0.0
    %444 = vmatprep.subr.mxu0 0.0
    %445 = vmatpush2.xpose.msra.mxu0 0.0
    %446 = vmatprep.subr.mxu0 0.0
    %447 = vmatpush2.xpose.msra.mxu0 0.0
    %448 = vmatprep.subr.mxu0 0.0
    %449 = vmatpush2.xpose.msra.mxu0 0.0
    %450 = vmatprep.subr.mxu0 0.0
    %451 = vmatpush2.xpose.msra.mxu0 0.0
    %452 = vmatprep.subr.mxu0 0.0
    %453 = vmatpush2.xpose.msra.mxu0 0.0
    %454 = vmatprep.subr.mxu0 0.0
    %455 = vmatpush2.xpose.msra.mxu0 0.0
    %456 = vmatprep.subr.mxu0 0.0
    %457 = vmatpush2.xpose.msra.mxu0 0.0
    %458 = vmatprep.subr.mxu0 0.0
    %459 = vmatpush2.xpose.msra.mxu0 0.0
    %460 = vmatprep.subr.mxu0 0.0
    %461 = vmatpush2.xpose.msra.mxu0 0.0
    %462 = vmatprep.subr.mxu0 0.0
    %463 = vmatpush2.xpose.msra.mxu0 0.0
    %464 = vmatprep.subr.mxu0 0.0
    %465 = vmatpush2.xpose.msra.mxu0 0.0
    %466 = vmatprep.subr.mxu0 0.0
    %467 = vmatpush2.xpose.msra.mxu0 0.0
    %468 = vmatprep.subr.mxu0 0.0
    %469 = vmatpush2.xpose.msra.mxu0 0.0
    %470 = vmatprep.subr.mxu0 0.0
    %471 = vmatpush2.xpose.msra.mxu0 0.0
    %472 = vmatprep.mubr.f32.mxu0 0.0
    %473 = vmatmul.mubr.f32.gmra.mxu0 %v406
    %v474 = vpop.f32.mrf.mxu0
    %v475 = vadd.f32 %v232, %v474
    %v476 = vpop.f32.mrf.mxu0
    %477 = vdwg.mxu0
    %v478 = vsel %vm240, %v475, -inf
    %479 = vmax.xlane.f32.xlu0 %v478
    %v480 = vpop.xlane.xlu0 %479
    %v481 = vsub.f32 %v475, %v480
    %v482 = vmul.f32 %v481, 1.442695
    %v483 = vpow.pop %v482
    %v484 = vsel %vm240, %v483, 0.0
    %485 = vadd.xlane.f32.xlu0 %v484
    %v486 = vpop.xlane.xlu0 %485
    %v487 = vrcp.pop %v486
    %v488 = vmul.f32 %v483, %v487
    %v490 = vsel %vm240, %v488, 0
    %492 = vmatprep.subr.mxu0 0.0
    %493 = vmatpush1.msra.mxu0 0.0
    %494 = vmatprep.subr.mxu0 0.0
    %495 = vmatpush1.msra.mxu0 0.0
    %496 = vmatprep.subr.mxu0 0.0
    %497 = vmatpush1.msra.mxu0 0.0
    %498 = vmatprep.subr.mxu0 0.0
    %499 = vmatpush1.msra.mxu0 0.0
    %500 = vmatprep.subr.mxu0 0.0
    %501 = vmatpush1.msra.mxu0 0.0
    %502 = vmatprep.subr.mxu0 0.0
    %503 = vmatpush1.msra.mxu0 0.0
    %504 = vmatprep.subr.mxu0 0.0
    %505 = vmatpush1.msra.mxu0 0.0
    %506 = vmatprep.subr.mxu0 0.0
    %507 = vmatpush1.msra.mxu0 0.0
    %508 = vmatprep.subr.mxu0 0.0
    %509 = vmatpush1.msra.mxu0 0.0
    %510 = vmatprep.subr.mxu0 0.0
    %511 = vmatpush1.msra.mxu0 0.0
    %512 = vmatprep.subr.mxu0 0.0
    %513 = vmatpush1.msra.mxu0 0.0
    %514 = vmatprep.subr.mxu0 0.0
    %515 = vmatpush1.msra.mxu0 0.0
    %516 = vmatprep.subr.mxu0 0.0
    %517 = vmatpush1.msra.mxu0 0.0
    %518 = vmatprep.subr.mxu0 0.0
    %519 = vmatpush1.msra.mxu0 0.0
    %520 = vmatprep.subr.mxu0 0.0
    %521 = vmatpush1.msra.mxu0 0.0
    %522 = vmatprep.subr.mxu0 0.0
    %523 = vmatpush1.msra.mxu0 %v329
    %524 = vmatprep.subr.mxu0 0.0
    %525 = vmatpush2.msra.mxu0 0.0
    %526 = vmatprep.subr.mxu0 0.0
    %527 = vmatpush2.msra.mxu0 0.0
    %528 = vmatprep.subr.mxu0 0.0
    %529 = vmatpush2.msra.mxu0 0.0
    %530 = vmatprep.subr.mxu0 0.0
    %531 = vmatpush2.msra.mxu0 0.0
    %532 = vmatprep.subr.mxu0 0.0
    %533 = vmatpush2.msra.mxu0 0.0
    %534 = vmatprep.subr.mxu0 0.0
    %535 = vmatpush2.msra.mxu0 0.0
    %536 = vmatprep.subr.mxu0 0.0
    %537 = vmatpush2.msra.mxu0 0.0
    %538 = vmatprep.subr.mxu0 0.0
    %539 = vmatpush2.msra.mxu0 0.0
    %540 = vmatprep.subr.mxu0 0.0
    %541 = vmatpush2.msra.mxu0 0.0
    %542 = vmatprep.subr.mxu0 0.0
    %543 = vmatpush2.msra.mxu0 0.0
    %544 = vmatprep.subr.mxu0 0.0
    %545 = vmatpush2.msra.mxu0 0.0
    %546 = vmatprep.subr.mxu0 0.0
    %547 = vmatpush2.msra.mxu0 0.0
    %548 = vmatprep.subr.mxu0 0.0
    %549 = vmatpush2.msra.mxu0 0.0
    %550 = vmatprep.subr.mxu0 0.0
    %551 = vmatpush2.msra.mxu0 0.0
    %552 = vmatprep.subr.mxu0 0.0
    %553 = vmatpush2.msra.mxu0 0.0
    %554 = vmatprep.subr.mxu0 0.0
    %555 = vmatpush2.msra.mxu0 0.0
    %556 = vmatprep.mubr.f32.mxu0 0.0
    %557 = vmatmul.mubr.f32.gmra.mxu0 %v490
    %v558 = vpop.f32.mrf.mxu0
    %v559 = vadd.f32 0.0, %v558
    %v560 = vpop.f32.mrf.mxu0
    %561 = vdwg.mxu0
    %v563 = vsel %vm240, %v559, 0
    %565 = vmatprep.subr.mxu0 0.0
    %566 = vmatpush1.msra.mxu0 0.0
    %567 = vmatprep.subr.mxu0 0.0
    %568 = vmatpush1.msra.mxu0 0.0
    %569 = vmatprep.subr.mxu0 0.0
    %570 = vmatpush1.msra.mxu0 0.0
    %571 = vmatprep.subr.mxu0 0.0
    %572 = vmatpush1.msra.mxu0 0.0
    %573 = vmatprep.subr.mxu0 0.0
    %574 = vmatpush1.msra.mxu0 0.0
    %575 = vmatprep.subr.mxu0 0.0
    %576 = vmatpush1.msra.mxu0 0.0
    %577 = vmatprep.subr.mxu0 0.0
    %578 = vmatpush1.msra.mxu0 0.0
    %579 = vmatprep.subr.mxu0 0.0
    %580 = vmatpush1.msra.mxu0 0.0
    %581 = vmatprep.subr.mxu0 0.0
    %582 = vmatpush1.msra.mxu0 0.0
    %583 = vmatprep.subr.mxu0 0.0
    %584 = vmatpush1.msra.mxu0 0.0
    %585 = vmatprep.subr.mxu0 0.0
    %586 = vmatpush1.msra.mxu0 0.0
    %587 = vmatprep.subr.mxu0 0.0
    %588 = vmatpush1.msra.mxu0 0.0
    %589 = vmatprep.subr.mxu0 0.0
    %590 = vmatpush1.msra.mxu0 0.0
    %591 = vmatprep.subr.mxu0 0.0
    %592 = vmatpush1.msra.mxu0 0.0
    %593 = vmatprep.subr.mxu0 0.0
    %594 = vmatpush1.msra.mxu0 0.0
    %595 = vmatprep.subr.mxu0 0.0
    %596 = vmatpush1.msra.mxu0 %v234
    %597 = vmatprep.subr.mxu0 0.0
    %598 = vmatpush2.msra.mxu0 0.0
    %599 = vmatprep.subr.mxu0 0.0
    %600 = vmatpush2.msra.mxu0 0.0
    %601 = vmatprep.subr.mxu0 0.0
    %602 = vmatpush2.msra.mxu0 0.0
    %603 = vmatprep.subr.mxu0 0.0
    %604 = vmatpush2.msra.mxu0 0.0
    %605 = vmatprep.subr.mxu0 0.0
    %606 = vmatpush2.msra.mxu0 0.0
    %607 = vmatprep.subr.mxu0 0.0
    %608 = vmatpush2.msra.mxu0 0.0
    %609 = vmatprep.subr.mxu0 0.0
    %610 = vmatpush2.msra.mxu0 0.0
    %611 = vmatprep.subr.mxu0 0.0
    %612 = vmatpush2.msra.mxu0 0.0
    %613 = vmatprep.subr.mxu0 0.0
    %614 = vmatpush2.msra.mxu0 0.0
    %615 = vmatprep.subr.mxu0 0.0
    %616 = vmatpush2.msra.mxu0 0.0
    %617 = vmatprep.subr.mxu0 0.0
    %618 = vmatpush2.msra.mxu0 0.0
    %619 = vmatprep.subr.mxu0 0.0
    %620 = vmatpush2.msra.mxu0 0.0
    %621 = vmatprep.subr.mxu0 0.0
    %622 = vmatpush2.msra.mxu0 0.0
    %623 = vmatprep.subr.mxu0 0.0
    %624 = vmatpush2.msra.mxu0 0.0
    %625 = vmatprep.subr.mxu0 0.0
    %626 = vmatpush2.msra.mxu0 0.0
    %627 = vmatprep.subr.mxu0 0.0
    %628 = vmatpush2.msra.mxu0 0.0
    %629 = vmatprep.mubr.f32.mxu0 0.0
    %630 = vmatmul.mubr.f32.gmra.mxu0 %v563
    %v631 = vpop.f32.mrf.mxu0
    %v632 = vadd.f32 0.0, %v631
    %v633 = vpop.f32.mrf.mxu0
    %634 = vdwg.mxu0
    %v636 = vsel %vm240, %v401, 0
    %638 = vmatprep.subr.mxu0 0.0
    %639 = vmatpush1.msra.mxu0 0.0
    %640 = vmatprep.subr.mxu0 0.0
    %641 = vmatpush1.msra.mxu0 0.0
    %642 = vmatprep.subr.mxu0 0.0
    %643 = vmatpush1.msra.mxu0 0.0
    %644 = vmatprep.subr.mxu0 0.0
    %645 = vmatpush1.msra.mxu0 0.0
    %646 = vmatprep.subr.mxu0 0.0
    %647 = vmatpush1.msra.mxu0 0.0
    %648 = vmatprep.subr.mxu0 0.0
    %649 = vmatpush1.msra.mxu0 0.0
    %650 = vmatprep.subr.mxu0 0.0
    %651 = vmatpush1.msra.mxu0 0.0
    %652 = vmatprep.subr.mxu0 0.0
    %653 = vmatpush1.msra.mxu0 0.0
    %654 = vmatprep.subr.mxu0 0.0
    %655 = vmatpush1.msra.mxu0 0.0
    %656 = vmatprep.subr.mxu0 0.0
    %657 = vmatpush1.msra.mxu0 0.0
    %658 = vmatprep.subr.mxu0 0.0
    %659 = vmatpush1.msra.mxu0 0.0
    %660 = vmatprep.subr.mxu0 0.0
    %661 = vmatpush1.msra.mxu0 0.0
    %662 = vmatprep.subr.mxu0 0.0
    %663 = vmatpush1.msra.mxu0 0.0
    %664 = vmatprep.subr.mxu0 0.0
    %665 = vmatpush1.msra.mxu0 0.0
    %666 = vmatprep.subr.mxu0 0.0
    %667 = vmatpush1.msra.mxu0 0.0
    %668 = vmatprep.subr.mxu0 0.0
    %669 = vmatpush1.msra.mxu0 %v233
    %670 = vmatprep.subr.mxu0 0.0
    %671 = vmatpush2.msra.mxu0 0.0
    %672 = vmatprep.subr.mxu0 0.0
    %673 = vmatpush2.msra.mxu0 0.0
    %674 = vmatprep.subr.mxu0 0.0
    %675 = vmatpush2.msra.mxu0 0.0
    %676 = vmatprep.subr.mxu0 0.0
    %677 = vmatpush2.msra.mxu0 0.0
    %678 = vmatprep.subr.mxu0 0.0
    %679 = vmatpush2.msra.mxu0 0.0
    %680 = vmatprep.subr.mxu0 0.0
    %681 = vmatpush2.msra.mxu0 0.0
    %682 = vmatprep.subr.mxu0 0.0
    %683 = vmatpush2.msra.mxu0 0.0
    %684 = vmatprep.subr.mxu0 0.0
    %685 = vmatpush2.msra.mxu0 0.0
    %686 = vmatprep.subr.mxu0 0.0
    %687 = vmatpush2.msra.mxu0 0.0
    %688 = vmatprep.subr.mxu0 0.0
    %689 = vmatpush2.msra.mxu0 0.0
    %690 = vmatprep.subr.mxu0 0.0
    %691 = vmatpush2.msra.mxu0 0.0
    %692 = vmatprep.subr.mxu0 0.0
    %693 = vmatpush2.msra.mxu0 0.0
    %694 = vmatprep.subr.mxu0 0.0
    %695 = vmatpush2.msra.mxu0 0.0
    %696 = vmatprep.subr.mxu0 0.0
    %697 = vmatpush2.msra.mxu0 0.0
    %698 = vmatprep.subr.mxu0 0.0
    %699 = vmatpush2.msra.mxu0 0.0
    %700 = vmatprep.subr.mxu0 0.0
    %701 = vmatpush2.msra.mxu0 0.0
    %702 = vmatprep.mubr.f32.mxu0 0.0
    %703 = vmatmul.mubr.f32.gmra.mxu0 %v636
    %v704 = vpop.f32.mrf.mxu0
    %v705 = vadd.f32 %v632, %v704
    %v706 = vpop.f32.mrf.mxu0
    %707 = vdwg.mxu0
    %708 = vrot.lane.b32.xlu0 %v197, 112
    %v709 = vpop.permute.xlu0 %708
    %710 = vrot.lane.b32.xlu0 %v225, 88
    %v711 = vpop.permute.xlu0 %710
    %v712 = vsel %vm240, %v709, 0
    %v714 = vsel %vm240, %v711, 0
    %716 = vmatprep.subr.mxu0 0.0
    %717 = vmatpush1.xpose.msra.mxu0 0.0
    %718 = vmatprep.subr.mxu0 0.0
    %719 = vmatpush1.xpose.msra.mxu0 0.0
    %720 = vmatprep.subr.mxu0 0.0
    %721 = vmatpush1.xpose.msra.mxu0 0.0
    %722 = vmatprep.subr.mxu0 0.0
    %723 = vmatpush1.xpose.msra.mxu0 0.0
    %724 = vmatprep.subr.mxu0 0.0
    %725 = vmatpush1.xpose.msra.mxu0 0.0
    %726 = vmatprep.subr.mxu0 0.0
    %727 = vmatpush1.xpose.msra.mxu0 0.0
    %728 = vmatprep.subr.mxu0 0.0
    %729 = vmatpush1.xpose.msra.mxu0 0.0
    %730 = vmatprep.subr.mxu0 0.0
    %731 = vmatpush1.xpose.msra.mxu0 0.0
    %732 = vmatprep.subr.mxu0 0.0
    %733 = vmatpush1.xpose.msra.mxu0 0.0
    %734 = vmatprep.subr.mxu0 0.0
    %735 = vmatpush1.xpose.msra.mxu0 0.0
    %736 = vmatprep.subr.mxu0 0.0
    %737 = vmatpush1.xpose.msra.mxu0 0.0
    %738 = vmatprep.subr.mxu0 0.0
    %739 = vmatpush1.xpose.msra.mxu0 0.0
    %740 = vmatprep.subr.mxu0 0.0
    %741 = vmatpush1.xpose.msra.mxu0 0.0
    %742 = vmatprep.subr.mxu0 0.0
    %743 = vmatpush1.xpose.msra.mxu0 0.0
    %744 = vmatprep.subr.mxu0 0.0
    %745 = vmatpush1.xpose.msra.mxu0 0.0
    %746 = vmatprep.subr.mxu0 0.0
    %747 = vmatpush1.xpose.msra.mxu0 %v714
    %748 = vmatprep.subr.mxu0 0.0
    %749 = vmatpush2.xpose.msra.mxu0 0.0
    %750 = vmatprep.subr.mxu0 0.0
    %751 = vmatpush2.xpose.msra.mxu0 0.0
    %752 = vmatprep.subr.mxu0 0.0
    %753 = vmatpush2.xpose.msra.mxu0 0.0
    %754 = vmatprep.subr.mxu0 0.0
    %755 = vmatpush2.xpose.msra.mxu0 0.0
    %756 = vmatprep.subr.mxu0 0.0
    %757 = vmatpush2.xpose.msra.mxu0 0.0
    %758 = vmatprep.subr.mxu0 0.0
    %759 = vmatpush2.xpose.msra.mxu0 0.0
    %760 = vmatprep.subr.mxu0 0.0
    %761 = vmatpush2.xpose.msra.mxu0 0.0
    %762 = vmatprep.subr.mxu0 0.0
    %763 = vmatpush2.xpose.msra.mxu0 0.0
    %764 = vmatprep.subr.mxu0 0.0
    %765 = vmatpush2.xpose.msra.mxu0 0.0
    %766 = vmatprep.subr.mxu0 0.0
    %767 = vmatpush2.xpose.msra.mxu0 0.0
    %768 = vmatprep.subr.mxu0 0.0
    %769 = vmatpush2.xpose.msra.mxu0 0.0
    %770 = vmatprep.subr.mxu0 0.0
    %771 = vmatpush2.xpose.msra.mxu0 0.0
    %772 = vmatprep.subr.mxu0 0.0
    %773 = vmatpush2.xpose.msra.mxu0 0.0
    %774 = vmatprep.subr.mxu0 0.0
    %775 = vmatpush2.xpose.msra.mxu0 0.0
    %776 = vmatprep.subr.mxu0 0.0
    %777 = vmatpush2.xpose.msra.mxu0 0.0
    %778 = vmatprep.subr.mxu0 0.0
    %779 = vmatpush2.xpose.msra.mxu0 0.0
    %780 = vmatprep.mubr.f32.mxu0 0.0
    %781 = vmatmul.mubr.f32.gmra.mxu0 %v712
    %v782 = vpop.f32.mrf.mxu0
    %v783 = vadd.f32 %v232, %v782
    %v784 = vpop.f32.mrf.mxu0
    %785 = vdwg.mxu0
    %v786 = vsel %vm240, %v783, -inf
    %787 = vmax.xlane.f32.xlu0 %v786
    %v788 = vpop.xlane.xlu0 %787
    %v789 = vsub.f32 %v783, %v788
    %v790 = vmul.f32 %v789, 1.442695
    %v791 = vpow.pop %v790
    %v792 = vsel %vm240, %v791, 0.0
    %793 = vadd.xlane.f32.xlu0 %v792
    %v794 = vpop.xlane.xlu0 %793
    %v795 = vrcp.pop %v794
    %v796 = vmul.f32 %v791, %v795
    %797 = vrot.lane.b32.xlu0 %v165, 72
    %v798 = vpop.permute.xlu0 %797
    %v801 = vsel %vm240, %v796, 0
    %803 = vmatprep.subr.mxu0 0.0
    %804 = vmatpush1.msra.mxu0 0.0
    %805 = vmatprep.subr.mxu0 0.0
    %806 = vmatpush1.msra.mxu0 0.0
    %807 = vmatprep.subr.mxu0 0.0
    %808 = vmatpush1.msra.mxu0 0.0
    %809 = vmatprep.subr.mxu0 0.0
    %810 = vmatpush1.msra.mxu0 0.0
    %811 = vmatprep.subr.mxu0 0.0
    %812 = vmatpush1.msra.mxu0 0.0
    %813 = vmatprep.subr.mxu0 0.0
    %814 = vmatpush1.msra.mxu0 0.0
    %815 = vmatprep.subr.mxu0 0.0
    %816 = vmatpush1.msra.mxu0 0.0
    %817 = vmatprep.subr.mxu0 0.0
    %818 = vmatpush1.msra.mxu0 0.0
    %819 = vmatprep.subr.mxu0 0.0
    %820 = vmatpush1.msra.mxu0 0.0
    %821 = vmatprep.subr.mxu0 0.0
    %822 = vmatpush1.msra.mxu0 0.0
    %823 = vmatprep.subr.mxu0 0.0
    %824 = vmatpush1.msra.mxu0 0.0
    %825 = vmatprep.subr.mxu0 0.0
    %826 = vmatpush1.msra.mxu0 0.0
    %827 = vmatprep.subr.mxu0 0.0
    %828 = vmatpush1.msra.mxu0 0.0
    %829 = vmatprep.subr.mxu0 0.0
    %830 = vmatpush1.msra.mxu0 0.0
    %831 = vmatprep.subr.mxu0 0.0
    %832 = vmatpush1.msra.mxu0 0.0
    %833 = vmatprep.subr.mxu0 0.0
    %834 = vmatpush1.msra.mxu0 %v798
    %835 = vmatprep.subr.mxu0 0.0
    %836 = vmatpush2.msra.mxu0 0.0
    %837 = vmatprep.subr.mxu0 0.0
    %838 = vmatpush2.msra.mxu0 0.0
    %839 = vmatprep.subr.mxu0 0.0
    %840 = vmatpush2.msra.mxu0 0.0
    %841 = vmatprep.subr.mxu0 0.0
    %842 = vmatpush2.msra.mxu0 0.0
    %843 = vmatprep.subr.mxu0 0.0
    %844 = vmatpush2.msra.mxu0 0.0
    %845 = vmatprep.subr.mxu0 0.0
    %846 = vmatpush2.msra.mxu0 0.0
    %847 = vmatprep.subr.mxu0 0.0
    %848 = vmatpush2.msra.mxu0 0.0
    %849 = vmatprep.subr.mxu0 0.0
    %850 = vmatpush2.msra.mxu0 0.0
    %851 = vmatprep.subr.mxu0 0.0
    %852 = vmatpush2.msra.mxu0 0.0
    %853 = vmatprep.subr.mxu0 0.0
    %854 = vmatpush2.msra.mxu0 0.0
    %855 = vmatprep.subr.mxu0 0.0
    %856 = vmatpush2.msra.mxu0 0.0
    %857 = vmatprep.subr.mxu0 0.0
    %858 = vmatpush2.msra.mxu0 0.0
    %859 = vmatprep.subr.mxu0 0.0
    %860 = vmatpush2.msra.mxu0 0.0
    %861 = vmatprep.subr.mxu0 0.0
    %862 = vmatpush2.msra.mxu0 0.0
    %863 = vmatprep.subr.mxu0 0.0
    %864 = vmatpush2.msra.mxu0 0.0
    %865 = vmatprep.subr.mxu0 0.0
    %866 = vmatpush2.msra.mxu0 0.0
    %867 = vmatprep.mubr.f32.mxu0 0.0
    %868 = vmatmul.mubr.f32.gmra.mxu0 %v801
    %v869 = vpop.f32.mrf.mxu0
    %v870 = vadd.f32 0.0, %v869
    %v871 = vpop.f32.mrf.mxu0
    %872 = vdwg.mxu0
    %v874 = vsel %vm240, %v870, 0
    %876 = vmatprep.subr.mxu0 0.0
    %877 = vmatpush1.msra.mxu0 0.0
    %878 = vmatprep.subr.mxu0 0.0
    %879 = vmatpush1.msra.mxu0 0.0
    %880 = vmatprep.subr.mxu0 0.0
    %881 = vmatpush1.msra.mxu0 0.0
    %882 = vmatprep.subr.mxu0 0.0
    %883 = vmatpush1.msra.mxu0 0.0
    %884 = vmatprep.subr.mxu0 0.0
    %885 = vmatpush1.msra.mxu0 0.0
    %886 = vmatprep.subr.mxu0 0.0
    %887 = vmatpush1.msra.mxu0 0.0
    %888 = vmatprep.subr.mxu0 0.0
    %889 = vmatpush1.msra.mxu0 0.0
    %890 = vmatprep.subr.mxu0 0.0
    %891 = vmatpush1.msra.mxu0 0.0
    %892 = vmatprep.subr.mxu0 0.0
    %893 = vmatpush1.msra.mxu0 0.0
    %894 = vmatprep.subr.mxu0 0.0
    %895 = vmatpush1.msra.mxu0 0.0
    %896 = vmatprep.subr.mxu0 0.0
    %897 = vmatpush1.msra.mxu0 0.0
    %898 = vmatprep.subr.mxu0 0.0
    %899 = vmatpush1.msra.mxu0 0.0
    %900 = vmatprep.subr.mxu0 0.0
    %901 = vmatpush1.msra.mxu0 0.0
    %902 = vmatprep.subr.mxu0 0.0
    %903 = vmatpush1.msra.mxu0 0.0
    %904 = vmatprep.subr.mxu0 0.0
    %905 = vmatpush1.msra.mxu0 0.0
    %906 = vmatprep.subr.mxu0 0.0
    %907 = vmatpush1.msra.mxu0 %v235
    %908 = vmatprep.subr.mxu0 0.0
    %909 = vmatpush2.msra.mxu0 0.0
    %910 = vmatprep.subr.mxu0 0.0
    %911 = vmatpush2.msra.mxu0 0.0
    %912 = vmatprep.subr.mxu0 0.0
    %913 = vmatpush2.msra.mxu0 0.0
    %914 = vmatprep.subr.mxu0 0.0
    %915 = vmatpush2.msra.mxu0 0.0
    %916 = vmatprep.subr.mxu0 0.0
    %917 = vmatpush2.msra.mxu0 0.0
    %918 = vmatprep.subr.mxu0 0.0
    %919 = vmatpush2.msra.mxu0 0.0
    %920 = vmatprep.subr.mxu0 0.0
    %921 = vmatpush2.msra.mxu0 0.0
    %922 = vmatprep.subr.mxu0 0.0
    %923 = vmatpush2.msra.mxu0 0.0
    %924 = vmatprep.subr.mxu0 0.0
    %925 = vmatpush2.msra.mxu0 0.0
    %926 = vmatprep.subr.mxu0 0.0
    %927 = vmatpush2.msra.mxu0 0.0
    %928 = vmatprep.subr.mxu0 0.0
    %929 = vmatpush2.msra.mxu0 0.0
    %930 = vmatprep.subr.mxu0 0.0
    %931 = vmatpush2.msra.mxu0 0.0
    %932 = vmatprep.subr.mxu0 0.0
    %933 = vmatpush2.msra.mxu0 0.0
    %934 = vmatprep.subr.mxu0 0.0
    %935 = vmatpush2.msra.mxu0 0.0
    %936 = vmatprep.subr.mxu0 0.0
    %937 = vmatpush2.msra.mxu0 0.0
    %938 = vmatprep.subr.mxu0 0.0
    %939 = vmatpush2.msra.mxu0 0.0
    %940 = vmatprep.mubr.f32.mxu0 0.0
    %941 = vmatmul.mubr.f32.gmra.mxu0 %v874
    %v942 = vpop.f32.mrf.mxu0
    %v943 = vadd.f32 0.0, %v942
    %v944 = vpop.f32.mrf.mxu0
    %945 = vdwg.mxu0
    %v946 = vadd.f32 %v705, %v943
    %947 = vrot.lane.b32.xlu0 %v197, 104
    %v948 = vpop.permute.xlu0 %947
    %v949 = vsel %vm240, %v948, 0
    %951 = vmatprep.subr.mxu0 0.0
    %952 = vmatpush1.xpose.msra.mxu0 0.0
    %953 = vmatprep.subr.mxu0 0.0
    %954 = vmatpush1.xpose.msra.mxu0 0.0
    %955 = vmatprep.subr.mxu0 0.0
    %956 = vmatpush1.xpose.msra.mxu0 0.0
    %957 = vmatprep.subr.mxu0 0.0
    %958 = vmatpush1.xpose.msra.mxu0 0.0
    %959 = vmatprep.subr.mxu0 0.0
    %960 = vmatpush1.xpose.msra.mxu0 0.0
    %961 = vmatprep.subr.mxu0 0.0
    %962 = vmatpush1.xpose.msra.mxu0 0.0
    %963 = vmatprep.subr.mxu0 0.0
    %964 = vmatpush1.xpose.msra.mxu0 0.0
    %965 = vmatprep.subr.mxu0 0.0
    %966 = vmatpush1.xpose.msra.mxu0 0.0
    %967 = vmatprep.subr.mxu0 0.0
    %968 = vmatpush1.xpose.msra.mxu0 0.0
    %969 = vmatprep.subr.mxu0 0.0
    %970 = vmatpush1.xpose.msra.mxu0 0.0
    %971 = vmatprep.subr.mxu0 0.0
    %972 = vmatpush1.xpose.msra.mxu0 0.0
    %973 = vmatprep.subr.mxu0 0.0
    %974 = vmatpush1.xpose.msra.mxu0 0.0
    %975 = vmatprep.subr.mxu0 0.0
    %976 = vmatpush1.xpose.msra.mxu0 0.0
    %977 = vmatprep.subr.mxu0 0.0
    %978 = vmatpush1.xpose.msra.mxu0 0.0
    %979 = vmatprep.subr.mxu0 0.0
    %980 = vmatpush1.xpose.msra.mxu0 0.0
    %981 = vmatprep.subr.mxu0 0.0
    %982 = vmatpush1.xpose.msra.mxu0 %v714
    %983 = vmatprep.subr.mxu0 0.0
    %984 = vmatpush2.xpose.msra.mxu0 0.0
    %985 = vmatprep.subr.mxu0 0.0
    %986 = vmatpush2.xpose.msra.mxu0 0.0
    %987 = vmatprep.subr.mxu0 0.0
    %988 = vmatpush2.xpose.msra.mxu0 0.0
    %989 = vmatprep.subr.mxu0 0.0
    %990 = vmatpush2.xpose.msra.mxu0 0.0
    %991 = vmatprep.subr.mxu0 0.0
    %992 = vmatpush2.xpose.msra.mxu0 0.0
    %993 = vmatprep.subr.mxu0 0.0
    %994 = vmatpush2.xpose.msra.mxu0 0.0
    %995 = vmatprep.subr.mxu0 0.0
    %996 = vmatpush2.xpose.msra.mxu0 0.0
    %997 = vmatprep.subr.mxu0 0.0
    %998 = vmatpush2.xpose.msra.mxu0 0.0
    %999 = vmatprep.subr.mxu0 0.0
    %1000 = vmatpush2.xpose.msra.mxu0 0.0
    %1001 = vmatprep.subr.mxu0 0.0
    %1002 = vmatpush2.xpose.msra.mxu0 0.0
    %1003 = vmatprep.subr.mxu0 0.0
    %1004 = vmatpush2.xpose.msra.mxu0 0.0
    %1005 = vmatprep.subr.mxu0 0.0
    %1006 = vmatpush2.xpose.msra.mxu0 0.0
    %1007 = vmatprep.subr.mxu0 0.0
    %1008 = vmatpush2.xpose.msra.mxu0 0.0
    %1009 = vmatprep.subr.mxu0 0.0
    %1010 = vmatpush2.xpose.msra.mxu0 0.0
    %1011 = vmatprep.subr.mxu0 0.0
    %1012 = vmatpush2.xpose.msra.mxu0 0.0
    %1013 = vmatprep.subr.mxu0 0.0
    %1014 = vmatpush2.xpose.msra.mxu0 0.0
    %1015 = vmatprep.mubr.f32.mxu0 0.0
    %1016 = vmatmul.mubr.f32.gmra.mxu0 %v949
    %v1017 = vpop.f32.mrf.mxu0
    %v1018 = vadd.f32 %v232, %v1017
    %v1019 = vpop.f32.mrf.mxu0
    %1020 = vdwg.mxu0
    %v1021 = vsel %vm240, %v1018, -inf
    %1022 = vmax.xlane.f32.xlu0 %v1021
    %v1023 = vpop.xlane.xlu0 %1022
    %v1024 = vsub.f32 %v1018, %v1023
    %v1025 = vmul.f32 %v1024, 1.442695
    %v1026 = vpow.pop %v1025
    %v1027 = vsel %vm240, %v1026, 0.0
    %1028 = vadd.xlane.f32.xlu0 %v1027
    %v1029 = vpop.xlane.xlu0 %1028
    %v1030 = vrcp.pop %v1029
    %v1031 = vmul.f32 %v1026, %v1030
    %v1033 = vsel %vm240, %v1031, 0
    %1035 = vmatprep.subr.mxu0 0.0
    %1036 = vmatpush1.msra.mxu0 0.0
    %1037 = vmatprep.subr.mxu0 0.0
    %1038 = vmatpush1.msra.mxu0 0.0
    %1039 = vmatprep.subr.mxu0 0.0
    %1040 = vmatpush1.msra.mxu0 0.0
    %1041 = vmatprep.subr.mxu0 0.0
    %1042 = vmatpush1.msra.mxu0 0.0
    %1043 = vmatprep.subr.mxu0 0.0
    %1044 = vmatpush1.msra.mxu0 0.0
    %1045 = vmatprep.subr.mxu0 0.0
    %1046 = vmatpush1.msra.mxu0 0.0
    %1047 = vmatprep.subr.mxu0 0.0
    %1048 = vmatpush1.msra.mxu0 0.0
    %1049 = vmatprep.subr.mxu0 0.0
    %1050 = vmatpush1.msra.mxu0 0.0
    %1051 = vmatprep.subr.mxu0 0.0
    %1052 = vmatpush1.msra.mxu0 0.0
    %1053 = vmatprep.subr.mxu0 0.0
    %1054 = vmatpush1.msra.mxu0 0.0
    %1055 = vmatprep.subr.mxu0 0.0
    %1056 = vmatpush1.msra.mxu0 0.0
    %1057 = vmatprep.subr.mxu0 0.0
    %1058 = vmatpush1.msra.mxu0 0.0
    %1059 = vmatprep.subr.mxu0 0.0
    %1060 = vmatpush1.msra.mxu0 0.0
    %1061 = vmatprep.subr.mxu0 0.0
    %1062 = vmatpush1.msra.mxu0 0.0
    %1063 = vmatprep.subr.mxu0 0.0
    %1064 = vmatpush1.msra.mxu0 0.0
    %1065 = vmatprep.subr.mxu0 0.0
    %1066 = vmatpush1.msra.mxu0 %v798
    %1067 = vmatprep.subr.mxu0 0.0
    %1068 = vmatpush2.msra.mxu0 0.0
    %1069 = vmatprep.subr.mxu0 0.0
    %1070 = vmatpush2.msra.mxu0 0.0
    %1071 = vmatprep.subr.mxu0 0.0
    %1072 = vmatpush2.msra.mxu0 0.0
    %1073 = vmatprep.subr.mxu0 0.0
    %1074 = vmatpush2.msra.mxu0 0.0
    %1075 = vmatprep.subr.mxu0 0.0
    %1076 = vmatpush2.msra.mxu0 0.0
    %1077 = vmatprep.subr.mxu0 0.0
    %1078 = vmatpush2.msra.mxu0 0.0
    %1079 = vmatprep.subr.mxu0 0.0
    %1080 = vmatpush2.msra.mxu0 0.0
    %1081 = vmatprep.subr.mxu0 0.0
    %1082 = vmatpush2.msra.mxu0 0.0
    %1083 = vmatprep.subr.mxu0 0.0
    %1084 = vmatpush2.msra.mxu0 0.0
    %1085 = vmatprep.subr.mxu0 0.0
    %1086 = vmatpush2.msra.mxu0 0.0
    %1087 = vmatprep.subr.mxu0 0.0
    %1088 = vmatpush2.msra.mxu0 0.0
    %1089 = vmatprep.subr.mxu0 0.0
    %1090 = vmatpush2.msra.mxu0 0.0
    %1091 = vmatprep.subr.mxu0 0.0
    %1092 = vmatpush2.msra.mxu0 0.0
    %1093 = vmatprep.subr.mxu0 0.0
    %1094 = vmatpush2.msra.mxu0 0.0
    %1095 = vmatprep.subr.mxu0 0.0
    %1096 = vmatpush2.msra.mxu0 0.0
    %1097 = vmatprep.subr.mxu0 0.0
    %1098 = vmatpush2.msra.mxu0 0.0
    %1099 = vmatprep.mubr.f32.mxu0 0.0
    %1100 = vmatmul.mubr.f32.gmra.mxu0 %v1033
    %v1101 = vpop.f32.mrf.mxu0
    %v1102 = vadd.f32 0.0, %v1101
    %v1103 = vpop.f32.mrf.mxu0
    %1104 = vdwg.mxu0
    %v1106 = vsel %vm240, %v1102, 0
    %1108 = vmatprep.subr.mxu0 0.0
    %1109 = vmatpush1.msra.mxu0 0.0
    %1110 = vmatprep.subr.mxu0 0.0
    %1111 = vmatpush1.msra.mxu0 0.0
    %1112 = vmatprep.subr.mxu0 0.0
    %1113 = vmatpush1.msra.mxu0 0.0
    %1114 = vmatprep.subr.mxu0 0.0
    %1115 = vmatpush1.msra.mxu0 0.0
    %1116 = vmatprep.subr.mxu0 0.0
    %1117 = vmatpush1.msra.mxu0 0.0
    %1118 = vmatprep.subr.mxu0 0.0
    %1119 = vmatpush1.msra.mxu0 0.0
    %1120 = vmatprep.subr.mxu0 0.0
    %1121 = vmatpush1.msra.mxu0 0.0
    %1122 = vmatprep.subr.mxu0 0.0
    %1123 = vmatpush1.msra.mxu0 0.0
    %1124 = vmatprep.subr.mxu0 0.0
    %1125 = vmatpush1.msra.mxu0 0.0
    %1126 = vmatprep.subr.mxu0 0.0
    %1127 = vmatpush1.msra.mxu0 0.0
    %1128 = vmatprep.subr.mxu0 0.0
    %1129 = vmatpush1.msra.mxu0 0.0
    %1130 = vmatprep.subr.mxu0 0.0
    %1131 = vmatpush1.msra.mxu0 0.0
    %1132 = vmatprep.subr.mxu0 0.0
    %1133 = vmatpush1.msra.mxu0 0.0
    %1134 = vmatprep.subr.mxu0 0.0
    %1135 = vmatpush1.msra.mxu0 0.0
    %1136 = vmatprep.subr.mxu0 0.0
    %1137 = vmatpush1.msra.mxu0 0.0
    %1138 = vmatprep.subr.mxu0 0.0
    %1139 = vmatpush1.msra.mxu0 %v236
    %1140 = vmatprep.subr.mxu0 0.0
    %1141 = vmatpush2.msra.mxu0 0.0
    %1142 = vmatprep.subr.mxu0 0.0
    %1143 = vmatpush2.msra.mxu0 0.0
    %1144 = vmatprep.subr.mxu0 0.0
    %1145 = vmatpush2.msra.mxu0 0.0
    %1146 = vmatprep.subr.mxu0 0.0
    %1147 = vmatpush2.msra.mxu0 0.0
    %1148 = vmatprep.subr.mxu0 0.0
    %1149 = vmatpush2.msra.mxu0 0.0
    %1150 = vmatprep.subr.mxu0 0.0
    %1151 = vmatpush2.msra.mxu0 0.0
    %1152 = vmatprep.subr.mxu0 0.0
    %1153 = vmatpush2.msra.mxu0 0.0
    %1154 = vmatprep.subr.mxu0 0.0
    %1155 = vmatpush2.msra.mxu0 0.0
    %1156 = vmatprep.subr.mxu0 0.0
    %1157 = vmatpush2.msra.mxu0 0.0
    %1158 = vmatprep.subr.mxu0 0.0
    %1159 = vmatpush2.msra.mxu0 0.0
    %1160 = vmatprep.subr.mxu0 0.0
    %1161 = vmatpush2.msra.mxu0 0.0
    %1162 = vmatprep.subr.mxu0 0.0
    %1163 = vmatpush2.msra.mxu0 0.0
    %1164 = vmatprep.subr.mxu0 0.0
    %1165 = vmatpush2.msra.mxu0 0.0
    %1166 = vmatprep.subr.mxu0 0.0
    %1167 = vmatpush2.msra.mxu0 0.0
    %1168 = vmatprep.subr.mxu0 0.0
    %1169 = vmatpush2.msra.mxu0 0.0
    %1170 = vmatprep.subr.mxu0 0.0
    %1171 = vmatpush2.msra.mxu0 0.0
    %1172 = vmatprep.mubr.f32.mxu0 0.0
    %1173 = vmatmul.mubr.f32.gmra.mxu0 %v1106
    %v1174 = vpop.f32.mrf.mxu0
    %v1175 = vadd.f32 0.0, %v1174
    %v1176 = vpop.f32.mrf.mxu0
    %1177 = vdwg.mxu0
    %v1178 = vadd.f32 %v946, %v1175
    %1180 = vrot.lane.b32.xlu0 %v226, 96
    %v1181 = vpop.permute.xlu0 %1180
    %v1183 = vsel %vm240, %v198, 0
    %v1185 = vsel %vm240, %v1181, 0
    %1187 = vmatprep.subr.mxu0 0.0
    %1188 = vmatpush1.xpose.msra.mxu0 0.0
    %1189 = vmatprep.subr.mxu0 0.0
    %1190 = vmatpush1.xpose.msra.mxu0 0.0
    %1191 = vmatprep.subr.mxu0 0.0
    %1192 = vmatpush1.xpose.msra.mxu0 0.0
    %1193 = vmatprep.subr.mxu0 0.0
    %1194 = vmatpush1.xpose.msra.mxu0 0.0
    %1195 = vmatprep.subr.mxu0 0.0
    %1196 = vmatpush1.xpose.msra.mxu0 0.0
    %1197 = vmatprep.subr.mxu0 0.0
    %1198 = vmatpush1.xpose.msra.mxu0 0.0
    %1199 = vmatprep.subr.mxu0 0.0
    %1200 = vmatpush1.xpose.msra.mxu0 0.0
    %1201 = vmatprep.subr.mxu0 0.0
    %1202 = vmatpush1.xpose.msra.mxu0 0.0
    %1203 = vmatprep.subr.mxu0 0.0
    %1204 = vmatpush1.xpose.msra.mxu0 0.0
    %1205 = vmatprep.subr.mxu0 0.0
    %1206 = vmatpush1.xpose.msra.mxu0 0.0
    %1207 = vmatprep.subr.mxu0 0.0
    %1208 = vmatpush1.xpose.msra.mxu0 0.0
    %1209 = vmatprep.subr.mxu0 0.0
    %1210 = vmatpush1.xpose.msra.mxu0 0.0
    %1211 = vmatprep.subr.mxu0 0.0
    %1212 = vmatpush1.xpose.msra.mxu0 0.0
    %1213 = vmatprep.subr.mxu0 0.0
    %1214 = vmatpush1.xpose.msra.mxu0 0.0
    %1215 = vmatprep.subr.mxu0 0.0
    %1216 = vmatpush1.xpose.msra.mxu0 0.0
    %1217 = vmatprep.subr.mxu0 0.0
    %1218 = vmatpush1.xpose.msra.mxu0 %v1185
    %1219 = vmatprep.subr.mxu0 0.0
    %1220 = vmatpush2.xpose.msra.mxu0 0.0
    %1221 = vmatprep.subr.mxu0 0.0
    %1222 = vmatpush2.xpose.msra.mxu0 0.0
    %1223 = vmatprep.subr.mxu0 0.0
    %1224 = vmatpush2.xpose.msra.mxu0 0.0
    %1225 = vmatprep.subr.mxu0 0.0
    %1226 = vmatpush2.xpose.msra.mxu0 0.0
    %1227 = vmatprep.subr.mxu0 0.0
    %1228 = vmatpush2.xpose.msra.mxu0 0.0
    %1229 = vmatprep.subr.mxu0 0.0
    %1230 = vmatpush2.xpose.msra.mxu0 0.0
    %1231 = vmatprep.subr.mxu0 0.0
    %1232 = vmatpush2.xpose.msra.mxu0 0.0
    %1233 = vmatprep.subr.mxu0 0.0
    %1234 = vmatpush2.xpose.msra.mxu0 0.0
    %1235 = vmatprep.subr.mxu0 0.0
    %1236 = vmatpush2.xpose.msra.mxu0 0.0
    %1237 = vmatprep.subr.mxu0 0.0
    %1238 = vmatpush2.xpose.msra.mxu0 0.0
    %1239 = vmatprep.subr.mxu0 0.0
    %1240 = vmatpush2.xpose.msra.mxu0 0.0
    %1241 = vmatprep.subr.mxu0 0.0
    %1242 = vmatpush2.xpose.msra.mxu0 0.0
    %1243 = vmatprep.subr.mxu0 0.0
    %1244 = vmatpush2.xpose.msra.mxu0 0.0
    %1245 = vmatprep.subr.mxu0 0.0
    %1246 = vmatpush2.xpose.msra.mxu0 0.0
    %1247 = vmatprep.subr.mxu0 0.0
    %1248 = vmatpush2.xpose.msra.mxu0 0.0
    %1249 = vmatprep.subr.mxu0 0.0
    %1250 = vmatpush2.xpose.msra.mxu0 0.0
    %1251 = vmatprep.mubr.f32.mxu0 0.0
    %1252 = vmatmul.mubr.f32.gmra.mxu0 %v1183
    %v1253 = vpop.f32.mrf.mxu0
    %v1254 = vadd.f32 %v232, %v1253
    %v1255 = vpop.f32.mrf.mxu0
    %1256 = vdwg.mxu0
    %v1257 = vsel %vm240, %v1254, -inf
    %1258 = vmax.xlane.f32.xlu0 %v1257
    %v1259 = vpop.xlane.xlu0 %1258
    %v1260 = vsub.f32 %v1254, %v1259
    %v1261 = vmul.f32 %v1260, 1.442695
    %v1262 = vpow.pop %v1261
    %v1263 = vsel %vm240, %v1262, 0.0
    %1264 = vadd.xlane.f32.xlu0 %v1263
    %v1265 = vpop.xlane.xlu0 %1264
    %v1266 = vrcp.pop %v1265
    %v1267 = vmul.f32 %v1262, %v1266
    %1269 = vrot.lane.b32.xlu0 %v170, 80
    %v1270 = vpop.permute.xlu0 %1269
    %v1273 = vsel %vm240, %v1267, 0
    %1275 = vmatprep.subr.mxu0 0.0
    %1276 = vmatpush1.msra.mxu0 0.0
    %1277 = vmatprep.subr.mxu0 0.0
    %1278 = vmatpush1.msra.mxu0 0.0
    %1279 = vmatprep.subr.mxu0 0.0
    %1280 = vmatpush1.msra.mxu0 0.0
    %1281 = vmatprep.subr.mxu0 0.0
    %1282 = vmatpush1.msra.mxu0 0.0
    %1283 = vmatprep.subr.mxu0 0.0
    %1284 = vmatpush1.msra.mxu0 0.0
    %1285 = vmatprep.subr.mxu0 0.0
    %1286 = vmatpush1.msra.mxu0 0.0
    %1287 = vmatprep.subr.mxu0 0.0
    %1288 = vmatpush1.msra.mxu0 0.0
    %1289 = vmatprep.subr.mxu0 0.0
    %1290 = vmatpush1.msra.mxu0 0.0
    %1291 = vmatprep.subr.mxu0 0.0
    %1292 = vmatpush1.msra.mxu0 0.0
    %1293 = vmatprep.subr.mxu0 0.0
    %1294 = vmatpush1.msra.mxu0 0.0
    %1295 = vmatprep.subr.mxu0 0.0
    %1296 = vmatpush1.msra.mxu0 0.0
    %1297 = vmatprep.subr.mxu0 0.0
    %1298 = vmatpush1.msra.mxu0 0.0
    %1299 = vmatprep.subr.mxu0 0.0
    %1300 = vmatpush1.msra.mxu0 0.0
    %1301 = vmatprep.subr.mxu0 0.0
    %1302 = vmatpush1.msra.mxu0 0.0
    %1303 = vmatprep.subr.mxu0 0.0
    %1304 = vmatpush1.msra.mxu0 0.0
    %1305 = vmatprep.subr.mxu0 0.0
    %1306 = vmatpush1.msra.mxu0 %v1270
    %1307 = vmatprep.subr.mxu0 0.0
    %1308 = vmatpush2.msra.mxu0 0.0
    %1309 = vmatprep.subr.mxu0 0.0
    %1310 = vmatpush2.msra.mxu0 0.0
    %1311 = vmatprep.subr.mxu0 0.0
    %1312 = vmatpush2.msra.mxu0 0.0
    %1313 = vmatprep.subr.mxu0 0.0
    %1314 = vmatpush2.msra.mxu0 0.0
    %1315 = vmatprep.subr.mxu0 0.0
    %1316 = vmatpush2.msra.mxu0 0.0
    %1317 = vmatprep.subr.mxu0 0.0
    %1318 = vmatpush2.msra.mxu0 0.0
    %1319 = vmatprep.subr.mxu0 0.0
    %1320 = vmatpush2.msra.mxu0 0.0
    %1321 = vmatprep.subr.mxu0 0.0
    %1322 = vmatpush2.msra.mxu0 0.0
    %1323 = vmatprep.subr.mxu0 0.0
    %1324 = vmatpush2.msra.mxu0 0.0
    %1325 = vmatprep.subr.mxu0 0.0
    %1326 = vmatpush2.msra.mxu0 0.0
    %1327 = vmatprep.subr.mxu0 0.0
    %1328 = vmatpush2.msra.mxu0 0.0
    %1329 = vmatprep.subr.mxu0 0.0
    %1330 = vmatpush2.msra.mxu0 0.0
    %1331 = vmatprep.subr.mxu0 0.0
    %1332 = vmatpush2.msra.mxu0 0.0
    %1333 = vmatprep.subr.mxu0 0.0
    %1334 = vmatpush2.msra.mxu0 0.0
    %1335 = vmatprep.subr.mxu0 0.0
    %1336 = vmatpush2.msra.mxu0 0.0
    %1337 = vmatprep.subr.mxu0 0.0
    %1338 = vmatpush2.msra.mxu0 0.0
    %1339 = vmatprep.mubr.f32.mxu0 0.0
    %1340 = vmatmul.mubr.f32.gmra.mxu0 %v1273
    %v1341 = vpop.f32.mrf.mxu0
    %v1342 = vadd.f32 0.0, %v1341
    %v1343 = vpop.f32.mrf.mxu0
    %1344 = vdwg.mxu0
    %1345 = vrot.lane.b32.xlu0 %v198, 120
    %v1346 = vpop.permute.xlu0 %1345
    %v1347 = vsel %vm240, %v1346, 0
    %1349 = vmatprep.subr.mxu0 0.0
    %1350 = vmatpush1.xpose.msra.mxu0 0.0
    %1351 = vmatprep.subr.mxu0 0.0
    %1352 = vmatpush1.xpose.msra.mxu0 0.0
    %1353 = vmatprep.subr.mxu0 0.0
    %1354 = vmatpush1.xpose.msra.mxu0 0.0
    %1355 = vmatprep.subr.mxu0 0.0
    %1356 = vmatpush1.xpose.msra.mxu0 0.0
    %1357 = vmatprep.subr.mxu0 0.0
    %1358 = vmatpush1.xpose.msra.mxu0 0.0
    %1359 = vmatprep.subr.mxu0 0.0
    %1360 = vmatpush1.xpose.msra.mxu0 0.0
    %1361 = vmatprep.subr.mxu0 0.0
    %1362 = vmatpush1.xpose.msra.mxu0 0.0
    %1363 = vmatprep.subr.mxu0 0.0
    %1364 = vmatpush1.xpose.msra.mxu0 0.0
    %1365 = vmatprep.subr.mxu0 0.0
    %1366 = vmatpush1.xpose.msra.mxu0 0.0
    %1367 = vmatprep.subr.mxu0 0.0
    %1368 = vmatpush1.xpose.msra.mxu0 0.0
    %1369 = vmatprep.subr.mxu0 0.0
    %1370 = vmatpush1.xpose.msra.mxu0 0.0
    %1371 = vmatprep.subr.mxu0 0.0
    %1372 = vmatpush1.xpose.msra.mxu0 0.0
    %1373 = vmatprep.subr.mxu0 0.0
    %1374 = vmatpush1.xpose.msra.mxu0 0.0
    %1375 = vmatprep.subr.mxu0 0.0
    %1376 = vmatpush1.xpose.msra.mxu0 0.0
    %1377 = vmatprep.subr.mxu0 0.0
    %1378 = vmatpush1.xpose.msra.mxu0 0.0
    %1379 = vmatprep.subr.mxu0 0.0
    %1380 = vmatpush1.xpose.msra.mxu0 %v1185
    %1381 = vmatprep.subr.mxu0 0.0
    %1382 = vmatpush2.xpose.msra.mxu0 0.0
    %1383 = vmatprep.subr.mxu0 0.0
    %1384 = vmatpush2.xpose.msra.mxu0 0.0
    %1385 = vmatprep.subr.mxu0 0.0
    %1386 = vmatpush2.xpose.msra.mxu0 0.0
    %1387 = vmatprep.subr.mxu0 0.0
    %1388 = vmatpush2.xpose.msra.mxu0 0.0
    %1389 = vmatprep.subr.mxu0 0.0
    %1390 = vmatpush2.xpose.msra.mxu0 0.0
    %1391 = vmatprep.subr.mxu0 0.0
    %1392 = vmatpush2.xpose.msra.mxu0 0.0
    %1393 = vmatprep.subr.mxu0 0.0
    %1394 = vmatpush2.xpose.msra.mxu0 0.0
    %1395 = vmatprep.subr.mxu0 0.0
    %1396 = vmatpush2.xpose.msra.mxu0 0.0
    %1397 = vmatprep.subr.mxu0 0.0
    %1398 = vmatpush2.xpose.msra.mxu0 0.0
    %1399 = vmatprep.subr.mxu0 0.0
    %1400 = vmatpush2.xpose.msra.mxu0 0.0
    %1401 = vmatprep.subr.mxu0 0.0
    %1402 = vmatpush2.xpose.msra.mxu0 0.0
    %1403 = vmatprep.subr.mxu0 0.0
    %1404 = vmatpush2.xpose.msra.mxu0 0.0
    %1405 = vmatprep.subr.mxu0 0.0
    %1406 = vmatpush2.xpose.msra.mxu0 0.0
    %1407 = vmatprep.subr.mxu0 0.0
    %1408 = vmatpush2.xpose.msra.mxu0 0.0
    %1409 = vmatprep.subr.mxu0 0.0
    %1410 = vmatpush2.xpose.msra.mxu0 0.0
    %1411 = vmatprep.subr.mxu0 0.0
    %1412 = vmatpush2.xpose.msra.mxu0 0.0
    %1413 = vmatprep.mubr.f32.mxu0 0.0
    %1414 = vmatmul.mubr.f32.gmra.mxu0 %v1347
    %v1415 = vpop.f32.mrf.mxu0
    %v1416 = vadd.f32 %v232, %v1415
    %v1417 = vpop.f32.mrf.mxu0
    %1418 = vdwg.mxu0
    %v1419 = vsel %vm240, %v1416, -inf
    %1420 = vmax.xlane.f32.xlu0 %v1419
    %v1421 = vpop.xlane.xlu0 %1420
    %v1422 = vsub.f32 %v1416, %v1421
    %v1423 = vmul.f32 %v1422, 1.442695
    %v1424 = vpow.pop %v1423
    %v1425 = vsel %vm240, %v1424, 0.0
    %1426 = vadd.xlane.f32.xlu0 %v1425
    %v1427 = vpop.xlane.xlu0 %1426
    %v1428 = vrcp.pop %v1427
    %v1429 = vmul.f32 %v1424, %v1428
    %v1431 = vsel %vm240, %v1429, 0
    %1433 = vmatprep.subr.mxu0 0.0
    %1434 = vmatpush1.msra.mxu0 0.0
    %1435 = vmatprep.subr.mxu0 0.0
    %1436 = vmatpush1.msra.mxu0 0.0
    %1437 = vmatprep.subr.mxu0 0.0
    %1438 = vmatpush1.msra.mxu0 0.0
    %1439 = vmatprep.subr.mxu0 0.0
    %1440 = vmatpush1.msra.mxu0 0.0
    %1441 = vmatprep.subr.mxu0 0.0
    %1442 = vmatpush1.msra.mxu0 0.0
    %1443 = vmatprep.subr.mxu0 0.0
    %1444 = vmatpush1.msra.mxu0 0.0
    %1445 = vmatprep.subr.mxu0 0.0
    %1446 = vmatpush1.msra.mxu0 0.0
    %1447 = vmatprep.subr.mxu0 0.0
    %1448 = vmatpush1.msra.mxu0 0.0
    %1449 = vmatprep.subr.mxu0 0.0
    %1450 = vmatpush1.msra.mxu0 0.0
    %1451 = vmatprep.subr.mxu0 0.0
    %1452 = vmatpush1.msra.mxu0 0.0
    %1453 = vmatprep.subr.mxu0 0.0
    %1454 = vmatpush1.msra.mxu0 0.0
    %1455 = vmatprep.subr.mxu0 0.0
    %1456 = vmatpush1.msra.mxu0 0.0
    %1457 = vmatprep.subr.mxu0 0.0
    %1458 = vmatpush1.msra.mxu0 0.0
    %1459 = vmatprep.subr.mxu0 0.0
    %1460 = vmatpush1.msra.mxu0 0.0
    %1461 = vmatprep.subr.mxu0 0.0
    %1462 = vmatpush1.msra.mxu0 0.0
    %1463 = vmatprep.subr.mxu0 0.0
    %1464 = vmatpush1.msra.mxu0 %v1270
    %1465 = vmatprep.subr.mxu0 0.0
    %1466 = vmatpush2.msra.mxu0 0.0
    %1467 = vmatprep.subr.mxu0 0.0
    %1468 = vmatpush2.msra.mxu0 0.0
    %1469 = vmatprep.subr.mxu0 0.0
    %1470 = vmatpush2.msra.mxu0 0.0
    %1471 = vmatprep.subr.mxu0 0.0
    %1472 = vmatpush2.msra.mxu0 0.0
    %1473 = vmatprep.subr.mxu0 0.0
    %1474 = vmatpush2.msra.mxu0 0.0
    %1475 = vmatprep.subr.mxu0 0.0
    %1476 = vmatpush2.msra.mxu0 0.0
    %1477 = vmatprep.subr.mxu0 0.0
    %1478 = vmatpush2.msra.mxu0 0.0
    %1479 = vmatprep.subr.mxu0 0.0
    %1480 = vmatpush2.msra.mxu0 0.0
    %1481 = vmatprep.subr.mxu0 0.0
    %1482 = vmatpush2.msra.mxu0 0.0
    %1483 = vmatprep.subr.mxu0 0.0
    %1484 = vmatpush2.msra.mxu0 0.0
    %1485 = vmatprep.subr.mxu0 0.0
    %1486 = vmatpush2.msra.mxu0 0.0
    %1487 = vmatprep.subr.mxu0 0.0
    %1488 = vmatpush2.msra.mxu0 0.0
    %1489 = vmatprep.subr.mxu0 0.0
    %1490 = vmatpush2.msra.mxu0 0.0
    %1491 = vmatprep.subr.mxu0 0.0
    %1492 = vmatpush2.msra.mxu0 0.0
    %1493 = vmatprep.subr.mxu0 0.0
    %1494 = vmatpush2.msra.mxu0 0.0
    %1495 = vmatprep.subr.mxu0 0.0
    %1496 = vmatpush2.msra.mxu0 0.0
    %1497 = vmatprep.mubr.f32.mxu0 0.0
    %1498 = vmatmul.mubr.f32.gmra.mxu0 %v1431
    %v1499 = vpop.f32.mrf.mxu0
    %v1500 = vadd.f32 0.0, %v1499
    %v1501 = vpop.f32.mrf.mxu0
    %1502 = vdwg.mxu0
    %v1504 = vsel %vm240, %v1500, 0
    %1506 = vmatprep.subr.mxu0 0.0
    %1507 = vmatpush1.msra.mxu0 0.0
    %1508 = vmatprep.subr.mxu0 0.0
    %1509 = vmatpush1.msra.mxu0 0.0
    %1510 = vmatprep.subr.mxu0 0.0
    %1511 = vmatpush1.msra.mxu0 0.0
    %1512 = vmatprep.subr.mxu0 0.0
    %1513 = vmatpush1.msra.mxu0 0.0
    %1514 = vmatprep.subr.mxu0 0.0
    %1515 = vmatpush1.msra.mxu0 0.0
    %1516 = vmatprep.subr.mxu0 0.0
    %1517 = vmatpush1.msra.mxu0 0.0
    %1518 = vmatprep.subr.mxu0 0.0
    %1519 = vmatpush1.msra.mxu0 0.0
    %1520 = vmatprep.subr.mxu0 0.0
    %1521 = vmatpush1.msra.mxu0 0.0
    %1522 = vmatprep.subr.mxu0 0.0
    %1523 = vmatpush1.msra.mxu0 0.0
    %1524 = vmatprep.subr.mxu0 0.0
    %1525 = vmatpush1.msra.mxu0 0.0
    %1526 = vmatprep.subr.mxu0 0.0
    %1527 = vmatpush1.msra.mxu0 0.0
    %1528 = vmatprep.subr.mxu0 0.0
    %1529 = vmatpush1.msra.mxu0 0.0
    %1530 = vmatprep.subr.mxu0 0.0
    %1531 = vmatpush1.msra.mxu0 0.0
    %1532 = vmatprep.subr.mxu0 0.0
    %1533 = vmatpush1.msra.mxu0 0.0
    %1534 = vmatprep.subr.mxu0 0.0
    %1535 = vmatpush1.msra.mxu0 0.0
    %1536 = vmatprep.subr.mxu0 0.0
    %1537 = vmatpush1.msra.mxu0 %v234
    %1538 = vmatprep.subr.mxu0 0.0
    %1539 = vmatpush2.msra.mxu0 0.0
    %1540 = vmatprep.subr.mxu0 0.0
    %1541 = vmatpush2.msra.mxu0 0.0
    %1542 = vmatprep.subr.mxu0 0.0
    %1543 = vmatpush2.msra.mxu0 0.0
    %1544 = vmatprep.subr.mxu0 0.0
    %1545 = vmatpush2.msra.mxu0 0.0
    %1546 = vmatprep.subr.mxu0 0.0
    %1547 = vmatpush2.msra.mxu0 0.0
    %1548 = vmatprep.subr.mxu0 0.0
    %1549 = vmatpush2.msra.mxu0 0.0
    %1550 = vmatprep.subr.mxu0 0.0
    %1551 = vmatpush2.msra.mxu0 0.0
    %1552 = vmatprep.subr.mxu0 0.0
    %1553 = vmatpush2.msra.mxu0 0.0
    %1554 = vmatprep.subr.mxu0 0.0
    %1555 = vmatpush2.msra.mxu0 0.0
    %1556 = vmatprep.subr.mxu0 0.0
    %1557 = vmatpush2.msra.mxu0 0.0
    %1558 = vmatprep.subr.mxu0 0.0
    %1559 = vmatpush2.msra.mxu0 0.0
    %1560 = vmatprep.subr.mxu0 0.0
    %1561 = vmatpush2.msra.mxu0 0.0
    %1562 = vmatprep.subr.mxu0 0.0
    %1563 = vmatpush2.msra.mxu0 0.0
    %1564 = vmatprep.subr.mxu0 0.0
    %1565 = vmatpush2.msra.mxu0 0.0
    %1566 = vmatprep.subr.mxu0 0.0
    %1567 = vmatpush2.msra.mxu0 0.0
    %1568 = vmatprep.subr.mxu0 0.0
    %1569 = vmatpush2.msra.mxu0 0.0
    %1570 = vmatprep.mubr.f32.mxu0 0.0
    %1571 = vmatmul.mubr.f32.gmra.mxu0 %v1504
    %v1572 = vpop.f32.mrf.mxu0
    %v1573 = vadd.f32 0.0, %v1572
    %v1574 = vpop.f32.mrf.mxu0
    %1575 = vdwg.mxu0
    %v1577 = vsel %vm240, %v1342, 0
    %1579 = vmatprep.subr.mxu0 0.0
    %1580 = vmatpush1.msra.mxu0 0.0
    %1581 = vmatprep.subr.mxu0 0.0
    %1582 = vmatpush1.msra.mxu0 0.0
    %1583 = vmatprep.subr.mxu0 0.0
    %1584 = vmatpush1.msra.mxu0 0.0
    %1585 = vmatprep.subr.mxu0 0.0
    %1586 = vmatpush1.msra.mxu0 0.0
    %1587 = vmatprep.subr.mxu0 0.0
    %1588 = vmatpush1.msra.mxu0 0.0
    %1589 = vmatprep.subr.mxu0 0.0
    %1590 = vmatpush1.msra.mxu0 0.0
    %1591 = vmatprep.subr.mxu0 0.0
    %1592 = vmatpush1.msra.mxu0 0.0
    %1593 = vmatprep.subr.mxu0 0.0
    %1594 = vmatpush1.msra.mxu0 0.0
    %1595 = vmatprep.subr.mxu0 0.0
    %1596 = vmatpush1.msra.mxu0 0.0
    %1597 = vmatprep.subr.mxu0 0.0
    %1598 = vmatpush1.msra.mxu0 0.0
    %1599 = vmatprep.subr.mxu0 0.0
    %1600 = vmatpush1.msra.mxu0 0.0
    %1601 = vmatprep.subr.mxu0 0.0
    %1602 = vmatpush1.msra.mxu0 0.0
    %1603 = vmatprep.subr.mxu0 0.0
    %1604 = vmatpush1.msra.mxu0 0.0
    %1605 = vmatprep.subr.mxu0 0.0
    %1606 = vmatpush1.msra.mxu0 0.0
    %1607 = vmatprep.subr.mxu0 0.0
    %1608 = vmatpush1.msra.mxu0 0.0
    %1609 = vmatprep.subr.mxu0 0.0
    %1610 = vmatpush1.msra.mxu0 %v233
    %1611 = vmatprep.subr.mxu0 0.0
    %1612 = vmatpush2.msra.mxu0 0.0
    %1613 = vmatprep.subr.mxu0 0.0
    %1614 = vmatpush2.msra.mxu0 0.0
    %1615 = vmatprep.subr.mxu0 0.0
    %1616 = vmatpush2.msra.mxu0 0.0
    %1617 = vmatprep.subr.mxu0 0.0
    %1618 = vmatpush2.msra.mxu0 0.0
    %1619 = vmatprep.subr.mxu0 0.0
    %1620 = vmatpush2.msra.mxu0 0.0
    %1621 = vmatprep.subr.mxu0 0.0
    %1622 = vmatpush2.msra.mxu0 0.0
    %1623 = vmatprep.subr.mxu0 0.0
    %1624 = vmatpush2.msra.mxu0 0.0
    %1625 = vmatprep.subr.mxu0 0.0
    %1626 = vmatpush2.msra.mxu0 0.0
    %1627 = vmatprep.subr.mxu0 0.0
    %1628 = vmatpush2.msra.mxu0 0.0
    %1629 = vmatprep.subr.mxu0 0.0
    %1630 = vmatpush2.msra.mxu0 0.0
    %1631 = vmatprep.subr.mxu0 0.0
    %1632 = vmatpush2.msra.mxu0 0.0
    %1633 = vmatprep.subr.mxu0 0.0
    %1634 = vmatpush2.msra.mxu0 0.0
    %1635 = vmatprep.subr.mxu0 0.0
    %1636 = vmatpush2.msra.mxu0 0.0
    %1637 = vmatprep.subr.mxu0 0.0
    %1638 = vmatpush2.msra.mxu0 0.0
    %1639 = vmatprep.subr.mxu0 0.0
    %1640 = vmatpush2.msra.mxu0 0.0
    %1641 = vmatprep.subr.mxu0 0.0
    %1642 = vmatpush2.msra.mxu0 0.0
    %1643 = vmatprep.mubr.f32.mxu0 0.0
    %1644 = vmatmul.mubr.f32.gmra.mxu0 %v1577
    %v1645 = vpop.f32.mrf.mxu0
    %v1646 = vadd.f32 %v1573, %v1645
    %v1647 = vpop.f32.mrf.mxu0
    %1648 = vdwg.mxu0
    %1649 = vrot.lane.b32.xlu0 %v198, 112
    %v1650 = vpop.permute.xlu0 %1649
    %1651 = vrot.lane.b32.xlu0 %v226, 88
    %v1652 = vpop.permute.xlu0 %1651
    %v1653 = vsel %vm240, %v1650, 0
    %v1655 = vsel %vm240, %v1652, 0
    %1657 = vmatprep.subr.mxu0 0.0
    %1658 = vmatpush1.xpose.msra.mxu0 0.0
    %1659 = vmatprep.subr.mxu0 0.0
    %1660 = vmatpush1.xpose.msra.mxu0 0.0
    %1661 = vmatprep.subr.mxu0 0.0
    %1662 = vmatpush1.xpose.msra.mxu0 0.0
    %1663 = vmatprep.subr.mxu0 0.0
    %1664 = vmatpush1.xpose.msra.mxu0 0.0
    %1665 = vmatprep.subr.mxu0 0.0
    %1666 = vmatpush1.xpose.msra.mxu0 0.0
    %1667 = vmatprep.subr.mxu0 0.0
    %1668 = vmatpush1.xpose.msra.mxu0 0.0
    %1669 = vmatprep.subr.mxu0 0.0
    %1670 = vmatpush1.xpose.msra.mxu0 0.0
    %1671 = vmatprep.subr.mxu0 0.0
    %1672 = vmatpush1.xpose.msra.mxu0 0.0
    %1673 = vmatprep.subr.mxu0 0.0
    %1674 = vmatpush1.xpose.msra.mxu0 0.0
    %1675 = vmatprep.subr.mxu0 0.0
    %1676 = vmatpush1.xpose.msra.mxu0 0.0
    %1677 = vmatprep.subr.mxu0 0.0
    %1678 = vmatpush1.xpose.msra.mxu0 0.0
    %1679 = vmatprep.subr.mxu0 0.0
    %1680 = vmatpush1.xpose.msra.mxu0 0.0
    %1681 = vmatprep.subr.mxu0 0.0
    %1682 = vmatpush1.xpose.msra.mxu0 0.0
    %1683 = vmatprep.subr.mxu0 0.0
    %1684 = vmatpush1.xpose.msra.mxu0 0.0
    %1685 = vmatprep.subr.mxu0 0.0
    %1686 = vmatpush1.xpose.msra.mxu0 0.0
    %1687 = vmatprep.subr.mxu0 0.0
    %1688 = vmatpush1.xpose.msra.mxu0 %v1655
    %1689 = vmatprep.subr.mxu0 0.0
    %1690 = vmatpush2.xpose.msra.mxu0 0.0
    %1691 = vmatprep.subr.mxu0 0.0
    %1692 = vmatpush2.xpose.msra.mxu0 0.0
    %1693 = vmatprep.subr.mxu0 0.0
    %1694 = vmatpush2.xpose.msra.mxu0 0.0
    %1695 = vmatprep.subr.mxu0 0.0
    %1696 = vmatpush2.xpose.msra.mxu0 0.0
    %1697 = vmatprep.subr.mxu0 0.0
    %1698 = vmatpush2.xpose.msra.mxu0 0.0
    %1699 = vmatprep.subr.mxu0 0.0
    %1700 = vmatpush2.xpose.msra.mxu0 0.0
    %1701 = vmatprep.subr.mxu0 0.0
    %1702 = vmatpush2.xpose.msra.mxu0 0.0
    %1703 = vmatprep.subr.mxu0 0.0
    %1704 = vmatpush2.xpose.msra.mxu0 0.0
    %1705 = vmatprep.subr.mxu0 0.0
    %1706 = vmatpush2.xpose.msra.mxu0 0.0
    %1707 = vmatprep.subr.mxu0 0.0
    %1708 = vmatpush2.xpose.msra.mxu0 0.0
    %1709 = vmatprep.subr.mxu0 0.0
    %1710 = vmatpush2.xpose.msra.mxu0 0.0
    %1711 = vmatprep.subr.mxu0 0.0
    %1712 = vmatpush2.xpose.msra.mxu0 0.0
    %1713 = vmatprep.subr.mxu0 0.0
    %1714 = vmatpush2.xpose.msra.mxu0 0.0
    %1715 = vmatprep.subr.mxu0 0.0
    %1716 = vmatpush2.xpose.msra.mxu0 0.0
    %1717 = vmatprep.subr.mxu0 0.0
    %1718 = vmatpush2.xpose.msra.mxu0 0.0
    %1719 = vmatprep.subr.mxu0 0.0
    %1720 = vmatpush2.xpose.msra.mxu0 0.0
    %1721 = vmatprep.mubr.f32.mxu0 0.0
    %1722 = vmatmul.mubr.f32.gmra.mxu0 %v1653
    %v1723 = vpop.f32.mrf.mxu0
    %v1724 = vadd.f32 %v232, %v1723
    %v1725 = vpop.f32.mrf.mxu0
    %1726 = vdwg.mxu0
    %v1727 = vsel %vm240, %v1724, -inf
    %1728 = vmax.xlane.f32.xlu0 %v1727
    %v1729 = vpop.xlane.xlu0 %1728
    %v1730 = vsub.f32 %v1724, %v1729
    %v1731 = vmul.f32 %v1730, 1.442695
    %v1732 = vpow.pop %v1731
    %v1733 = vsel %vm240, %v1732, 0.0
    %1734 = vadd.xlane.f32.xlu0 %v1733
    %v1735 = vpop.xlane.xlu0 %1734
    %v1736 = vrcp.pop %v1735
    %v1737 = vmul.f32 %v1732, %v1736
    %1738 = vrot.lane.b32.xlu0 %v170, 72
    %v1739 = vpop.permute.xlu0 %1738
    %v1742 = vsel %vm240, %v1737, 0
    %1744 = vmatprep.subr.mxu0 0.0
    %1745 = vmatpush1.msra.mxu0 0.0
    %1746 = vmatprep.subr.mxu0 0.0
    %1747 = vmatpush1.msra.mxu0 0.0
    %1748 = vmatprep.subr.mxu0 0.0
    %1749 = vmatpush1.msra.mxu0 0.0
    %1750 = vmatprep.subr.mxu0 0.0
    %1751 = vmatpush1.msra.mxu0 0.0
    %1752 = vmatprep.subr.mxu0 0.0
    %1753 = vmatpush1.msra.mxu0 0.0
    %1754 = vmatprep.subr.mxu0 0.0
    %1755 = vmatpush1.msra.mxu0 0.0
    %1756 = vmatprep.subr.mxu0 0.0
    %1757 = vmatpush1.msra.mxu0 0.0
    %1758 = vmatprep.subr.mxu0 0.0
    %1759 = vmatpush1.msra.mxu0 0.0
    %1760 = vmatprep.subr.mxu0 0.0
    %1761 = vmatpush1.msra.mxu0 0.0
    %1762 = vmatprep.subr.mxu0 0.0
    %1763 = vmatpush1.msra.mxu0 0.0
    %1764 = vmatprep.subr.mxu0 0.0
    %1765 = vmatpush1.msra.mxu0 0.0
    %1766 = vmatprep.subr.mxu0 0.0
    %1767 = vmatpush1.msra.mxu0 0.0
    %1768 = vmatprep.subr.mxu0 0.0
    %1769 = vmatpush1.msra.mxu0 0.0
    %1770 = vmatprep.subr.mxu0 0.0
    %1771 = vmatpush1.msra.mxu0 0.0
    %1772 = vmatprep.subr.mxu0 0.0
    %1773 = vmatpush1.msra.mxu0 0.0
    %1774 = vmatprep.subr.mxu0 0.0
    %1775 = vmatpush1.msra.mxu0 %v1739
    %1776 = vmatprep.subr.mxu0 0.0
    %1777 = vmatpush2.msra.mxu0 0.0
    %1778 = vmatprep.subr.mxu0 0.0
    %1779 = vmatpush2.msra.mxu0 0.0
    %1780 = vmatprep.subr.mxu0 0.0
    %1781 = vmatpush2.msra.mxu0 0.0
    %1782 = vmatprep.subr.mxu0 0.0
    %1783 = vmatpush2.msra.mxu0 0.0
    %1784 = vmatprep.subr.mxu0 0.0
    %1785 = vmatpush2.msra.mxu0 0.0
    %1786 = vmatprep.subr.mxu0 0.0
    %1787 = vmatpush2.msra.mxu0 0.0
    %1788 = vmatprep.subr.mxu0 0.0
    %1789 = vmatpush2.msra.mxu0 0.0
    %1790 = vmatprep.subr.mxu0 0.0
    %1791 = vmatpush2.msra.mxu0 0.0
    %1792 = vmatprep.subr.mxu0 0.0
    %1793 = vmatpush2.msra.mxu0 0.0
    %1794 = vmatprep.subr.mxu0 0.0
    %1795 = vmatpush2.msra.mxu0 0.0
    %1796 = vmatprep.subr.mxu0 0.0
    %1797 = vmatpush2.msra.mxu0 0.0
    %1798 = vmatprep.subr.mxu0 0.0
    %1799 = vmatpush2.msra.mxu0 0.0
    %1800 = vmatprep.subr.mxu0 0.0
    %1801 = vmatpush2.msra.mxu0 0.0
    %1802 = vmatprep.subr.mxu0 0.0
    %1803 = vmatpush2.msra.mxu0 0.0
    %1804 = vmatprep.subr.mxu0 0.0
    %1805 = vmatpush2.msra.mxu0 0.0
    %1806 = vmatprep.subr.mxu0 0.0
    %1807 = vmatpush2.msra.mxu0 0.0
    %1808 = vmatprep.mubr.f32.mxu0 0.0
    %1809 = vmatmul.mubr.f32.gmra.mxu0 %v1742
    %v1810 = vpop.f32.mrf.mxu0
    %v1811 = vadd.f32 0.0, %v1810
    %v1812 = vpop.f32.mrf.mxu0
    %1813 = vdwg.mxu0
    %v1815 = vsel %vm240, %v1811, 0
    %1817 = vmatprep.subr.mxu0 0.0
    %1818 = vmatpush1.msra.mxu0 0.0
    %1819 = vmatprep.subr.mxu0 0.0
    %1820 = vmatpush1.msra.mxu0 0.0
    %1821 = vmatprep.subr.mxu0 0.0
    %1822 = vmatpush1.msra.mxu0 0.0
    %1823 = vmatprep.subr.mxu0 0.0
    %1824 = vmatpush1.msra.mxu0 0.0
    %1825 = vmatprep.subr.mxu0 0.0
    %1826 = vmatpush1.msra.mxu0 0.0
    %1827 = vmatprep.subr.mxu0 0.0
    %1828 = vmatpush1.msra.mxu0 0.0
    %1829 = vmatprep.subr.mxu0 0.0
    %1830 = vmatpush1.msra.mxu0 0.0
    %1831 = vmatprep.subr.mxu0 0.0
    %1832 = vmatpush1.msra.mxu0 0.0
    %1833 = vmatprep.subr.mxu0 0.0
    %1834 = vmatpush1.msra.mxu0 0.0
    %1835 = vmatprep.subr.mxu0 0.0
    %1836 = vmatpush1.msra.mxu0 0.0
    %1837 = vmatprep.subr.mxu0 0.0
    %1838 = vmatpush1.msra.mxu0 0.0
    %1839 = vmatprep.subr.mxu0 0.0
    %1840 = vmatpush1.msra.mxu0 0.0
    %1841 = vmatprep.subr.mxu0 0.0
    %1842 = vmatpush1.msra.mxu0 0.0
    %1843 = vmatprep.subr.mxu0 0.0
    %1844 = vmatpush1.msra.mxu0 0.0
    %1845 = vmatprep.subr.mxu0 0.0
    %1846 = vmatpush1.msra.mxu0 0.0
    %1847 = vmatprep.subr.mxu0 0.0
    %1848 = vmatpush1.msra.mxu0 %v235
    %1849 = vmatprep.subr.mxu0 0.0
    %1850 = vmatpush2.msra.mxu0 0.0
    %1851 = vmatprep.subr.mxu0 0.0
    %1852 = vmatpush2.msra.mxu0 0.0
    %1853 = vmatprep.subr.mxu0 0.0
    %1854 = vmatpush2.msra.mxu0 0.0
    %1855 = vmatprep.subr.mxu0 0.0
    %1856 = vmatpush2.msra.mxu0 0.0
    %1857 = vmatprep.subr.mxu0 0.0
    %1858 = vmatpush2.msra.mxu0 0.0
    %1859 = vmatprep.subr.mxu0 0.0
    %1860 = vmatpush2.msra.mxu0 0.0
    %1861 = vmatprep.subr.mxu0 0.0
    %1862 = vmatpush2.msra.mxu0 0.0
    %1863 = vmatprep.subr.mxu0 0.0
    %1864 = vmatpush2.msra.mxu0 0.0
    %1865 = vmatprep.subr.mxu0 0.0
    %1866 = vmatpush2.msra.mxu0 0.0
    %1867 = vmatprep.subr.mxu0 0.0
    %1868 = vmatpush2.msra.mxu0 0.0
    %1869 = vmatprep.subr.mxu0 0.0
    %1870 = vmatpush2.msra.mxu0 0.0
    %1871 = vmatprep.subr.mxu0 0.0
    %1872 = vmatpush2.msra.mxu0 0.0
    %1873 = vmatprep.subr.mxu0 0.0
    %1874 = vmatpush2.msra.mxu0 0.0
    %1875 = vmatprep.subr.mxu0 0.0
    %1876 = vmatpush2.msra.mxu0 0.0
    %1877 = vmatprep.subr.mxu0 0.0
    %1878 = vmatpush2.msra.mxu0 0.0
    %1879 = vmatprep.subr.mxu0 0.0
    %1880 = vmatpush2.msra.mxu0 0.0
    %1881 = vmatprep.mubr.f32.mxu0 0.0
    %1882 = vmatmul.mubr.f32.gmra.mxu0 %v1815
    %v1883 = vpop.f32.mrf.mxu0
    %v1884 = vadd.f32 0.0, %v1883
    %v1885 = vpop.f32.mrf.mxu0
    %1886 = vdwg.mxu0
    %v1887 = vadd.f32 %v1646, %v1884
    %1888 = vrot.lane.b32.xlu0 %v198, 104
    %v1889 = vpop.permute.xlu0 %1888
    %v1890 = vsel %vm240, %v1889, 0
    %1892 = vmatprep.subr.mxu0 0.0
    %1893 = vmatpush1.xpose.msra.mxu0 0.0
    %1894 = vmatprep.subr.mxu0 0.0
    %1895 = vmatpush1.xpose.msra.mxu0 0.0
    %1896 = vmatprep.subr.mxu0 0.0
    %1897 = vmatpush1.xpose.msra.mxu0 0.0
    %1898 = vmatprep.subr.mxu0 0.0
    %1899 = vmatpush1.xpose.msra.mxu0 0.0
    %1900 = vmatprep.subr.mxu0 0.0
    %1901 = vmatpush1.xpose.msra.mxu0 0.0
    %1902 = vmatprep.subr.mxu0 0.0
    %1903 = vmatpush1.xpose.msra.mxu0 0.0
    %1904 = vmatprep.subr.mxu0 0.0
    %1905 = vmatpush1.xpose.msra.mxu0 0.0
    %1906 = vmatprep.subr.mxu0 0.0
    %1907 = vmatpush1.xpose.msra.mxu0 0.0
    %1908 = vmatprep.subr.mxu0 0.0
    %1909 = vmatpush1.xpose.msra.mxu0 0.0
    %1910 = vmatprep.subr.mxu0 0.0
    %1911 = vmatpush1.xpose.msra.mxu0 0.0
    %1912 = vmatprep.subr.mxu0 0.0
    %1913 = vmatpush1.xpose.msra.mxu0 0.0
    %1914 = vmatprep.subr.mxu0 0.0
    %1915 = vmatpush1.xpose.msra.mxu0 0.0
    %1916 = vmatprep.subr.mxu0 0.0
    %1917 = vmatpush1.xpose.msra.mxu0 0.0
    %1918 = vmatprep.subr.mxu0 0.0
    %1919 = vmatpush1.xpose.msra.mxu0 0.0
    %1920 = vmatprep.subr.mxu0 0.0
    %1921 = vmatpush1.xpose.msra.mxu0 0.0
    %1922 = vmatprep.subr.mxu0 0.0
    %1923 = vmatpush1.xpose.msra.mxu0 %v1655
    %1924 = vmatprep.subr.mxu0 0.0
    %1925 = vmatpush2.xpose.msra.mxu0 0.0
    %1926 = vmatprep.subr.mxu0 0.0
    %1927 = vmatpush2.xpose.msra.mxu0 0.0
    %1928 = vmatprep.subr.mxu0 0.0
    %1929 = vmatpush2.xpose.msra.mxu0 0.0
    %1930 = vmatprep.subr.mxu0 0.0
    %1931 = vmatpush2.xpose.msra.mxu0 0.0
    %1932 = vmatprep.subr.mxu0 0.0
    %1933 = vmatpush2.xpose.msra.mxu0 0.0
    %1934 = vmatprep.subr.mxu0 0.0
    %1935 = vmatpush2.xpose.msra.mxu0 0.0
    %1936 = vmatprep.subr.mxu0 0.0
    %1937 = vmatpush2.xpose.msra.mxu0 0.0
    %1938 = vmatprep.subr.mxu0 0.0
    %1939 = vmatpush2.xpose.msra.mxu0 0.0
    %1940 = vmatprep.subr.mxu0 0.0
    %1941 = vmatpush2.xpose.msra.mxu0 0.0
    %1942 = vmatprep.subr.mxu0 0.0
    %1943 = vmatpush2.xpose.msra.mxu0 0.0
    %1944 = vmatprep.subr.mxu0 0.0
    %1945 = vmatpush2.xpose.msra.mxu0 0.0
    %1946 = vmatprep.subr.mxu0 0.0
    %1947 = vmatpush2.xpose.msra.mxu0 0.0
    %1948 = vmatprep.subr.mxu0 0.0
    %1949 = vmatpush2.xpose.msra.mxu0 0.0
    %1950 = vmatprep.subr.mxu0 0.0
    %1951 = vmatpush2.xpose.msra.mxu0 0.0
    %1952 = vmatprep.subr.mxu0 0.0
    %1953 = vmatpush2.xpose.msra.mxu0 0.0
    %1954 = vmatprep.subr.mxu0 0.0
    %1955 = vmatpush2.xpose.msra.mxu0 0.0
    %1956 = vmatprep.mubr.f32.mxu0 0.0
    %1957 = vmatmul.mubr.f32.gmra.mxu0 %v1890
    %v1958 = vpop.f32.mrf.mxu0
    %v1959 = vadd.f32 %v232, %v1958
    %v1960 = vpop.f32.mrf.mxu0
    %1961 = vdwg.mxu0
    %v1962 = vsel %vm240, %v1959, -inf
    %1963 = vmax.xlane.f32.xlu0 %v1962
    %v1964 = vpop.xlane.xlu0 %1963
    %v1965 = vsub.f32 %v1959, %v1964
    %v1966 = vmul.f32 %v1965, 1.442695
    %v1967 = vpow.pop %v1966
    %v1968 = vsel %vm240, %v1967, 0.0
    %1969 = vadd.xlane.f32.xlu0 %v1968
    %v1970 = vpop.xlane.xlu0 %1969
    %v1971 = vrcp.pop %v1970
    %v1972 = vmul.f32 %v1967, %v1971
    %v1974 = vsel %vm240, %v1972, 0
    %1976 = vmatprep.subr.mxu0 0.0
    %1977 = vmatpush1.msra.mxu0 0.0
    %1978 = vmatprep.subr.mxu0 0.0
    %1979 = vmatpush1.msra.mxu0 0.0
    %1980 = vmatprep.subr.mxu0 0.0
    %1981 = vmatpush1.msra.mxu0 0.0
    %1982 = vmatprep.subr.mxu0 0.0
    %1983 = vmatpush1.msra.mxu0 0.0
    %1984 = vmatprep.subr.mxu0 0.0
    %1985 = vmatpush1.msra.mxu0 0.0
    %1986 = vmatprep.subr.mxu0 0.0
    %1987 = vmatpush1.msra.mxu0 0.0
    %1988 = vmatprep.subr.mxu0 0.0
    %1989 = vmatpush1.msra.mxu0 0.0
    %1990 = vmatprep.subr.mxu0 0.0
    %1991 = vmatpush1.msra.mxu0 0.0
    %1992 = vmatprep.subr.mxu0 0.0
    %1993 = vmatpush1.msra.mxu0 0.0
    %1994 = vmatprep.subr.mxu0 0.0
    %1995 = vmatpush1.msra.mxu0 0.0
    %1996 = vmatprep.subr.mxu0 0.0
    %1997 = vmatpush1.msra.mxu0 0.0
    %1998 = vmatprep.subr.mxu0 0.0
    %1999 = vmatpush1.msra.mxu0 0.0
    %2000 = vmatprep.subr.mxu0 0.0
    %2001 = vmatpush1.msra.mxu0 0.0
    %2002 = vmatprep.subr.mxu0 0.0
    %2003 = vmatpush1.msra.mxu0 0.0
    %2004 = vmatprep.subr.mxu0 0.0
    %2005 = vmatpush1.msra.mxu0 0.0
    %2006 = vmatprep.subr.mxu0 0.0
    %2007 = vmatpush1.msra.mxu0 %v1739
    %2008 = vmatprep.subr.mxu0 0.0
    %2009 = vmatpush2.msra.mxu0 0.0
    %2010 = vmatprep.subr.mxu0 0.0
    %2011 = vmatpush2.msra.mxu0 0.0
    %2012 = vmatprep.subr.mxu0 0.0
    %2013 = vmatpush2.msra.mxu0 0.0
    %2014 = vmatprep.subr.mxu0 0.0
    %2015 = vmatpush2.msra.mxu0 0.0
    %2016 = vmatprep.subr.mxu0 0.0
    %2017 = vmatpush2.msra.mxu0 0.0
    %2018 = vmatprep.subr.mxu0 0.0
    %2019 = vmatpush2.msra.mxu0 0.0
    %2020 = vmatprep.subr.mxu0 0.0
    %2021 = vmatpush2.msra.mxu0 0.0
    %2022 = vmatprep.subr.mxu0 0.0
    %2023 = vmatpush2.msra.mxu0 0.0
    %2024 = vmatprep.subr.mxu0 0.0
    %2025 = vmatpush2.msra.mxu0 0.0
    %2026 = vmatprep.subr.mxu0 0.0
    %2027 = vmatpush2.msra.mxu0 0.0
    %2028 = vmatprep.subr.mxu0 0.0
    %2029 = vmatpush2.msra.mxu0 0.0
    %2030 = vmatprep.subr.mxu0 0.0
    %2031 = vmatpush2.msra.mxu0 0.0
    %2032 = vmatprep.subr.mxu0 0.0
    %2033 = vmatpush2.msra.mxu0 0.0
    %2034 = vmatprep.subr.mxu0 0.0
    %2035 = vmatpush2.msra.mxu0 0.0
    %2036 = vmatprep.subr.mxu0 0.0
    %2037 = vmatpush2.msra.mxu0 0.0
    %2038 = vmatprep.subr.mxu0 0.0
    %2039 = vmatpush2.msra.mxu0 0.0
    %2040 = vmatprep.mubr.f32.mxu0 0.0
    %2041 = vmatmul.mubr.f32.gmra.mxu0 %v1974
    %v2042 = vpop.f32.mrf.mxu0
    %v2043 = vadd.f32 0.0, %v2042
    %v2044 = vpop.f32.mrf.mxu0
    %2045 = vdwg.mxu0
    %v2047 = vsel %vm240, %v2043, 0
    %2049 = vmatprep.subr.mxu0 0.0
    %2050 = vmatpush1.msra.mxu0 0.0
    %2051 = vmatprep.subr.mxu0 0.0
    %2052 = vmatpush1.msra.mxu0 0.0
    %2053 = vmatprep.subr.mxu0 0.0
    %2054 = vmatpush1.msra.mxu0 0.0
    %2055 = vmatprep.subr.mxu0 0.0
    %2056 = vmatpush1.msra.mxu0 0.0
    %2057 = vmatprep.subr.mxu0 0.0
    %2058 = vmatpush1.msra.mxu0 0.0
    %2059 = vmatprep.subr.mxu0 0.0
    %2060 = vmatpush1.msra.mxu0 0.0
    %2061 = vmatprep.subr.mxu0 0.0
    %2062 = vmatpush1.msra.mxu0 0.0
    %2063 = vmatprep.subr.mxu0 0.0
    %2064 = vmatpush1.msra.mxu0 0.0
    %2065 = vmatprep.subr.mxu0 0.0
    %2066 = vmatpush1.msra.mxu0 0.0
    %2067 = vmatprep.subr.mxu0 0.0
    %2068 = vmatpush1.msra.mxu0 0.0
    %2069 = vmatprep.subr.mxu0 0.0
    %2070 = vmatpush1.msra.mxu0 0.0
    %2071 = vmatprep.subr.mxu0 0.0
    %2072 = vmatpush1.msra.mxu0 0.0
    %2073 = vmatprep.subr.mxu0 0.0
    %2074 = vmatpush1.msra.mxu0 0.0
    %2075 = vmatprep.subr.mxu0 0.0
    %2076 = vmatpush1.msra.mxu0 0.0
    %2077 = vmatprep.subr.mxu0 0.0
    %2078 = vmatpush1.msra.mxu0 0.0
    %2079 = vmatprep.subr.mxu0 0.0
    %2080 = vmatpush1.msra.mxu0 %v236
    %2081 = vmatprep.subr.mxu0 0.0
    %2082 = vmatpush2.msra.mxu0 0.0
    %2083 = vmatprep.subr.mxu0 0.0
    %2084 = vmatpush2.msra.mxu0 0.0
    %2085 = vmatprep.subr.mxu0 0.0
    %2086 = vmatpush2.msra.mxu0 0.0
    %2087 = vmatprep.subr.mxu0 0.0
    %2088 = vmatpush2.msra.mxu0 0.0
    %2089 = vmatprep.subr.mxu0 0.0
    %2090 = vmatpush2.msra.mxu0 0.0
    %2091 = vmatprep.subr.mxu0 0.0
    %2092 = vmatpush2.msra.mxu0 0.0
    %2093 = vmatprep.subr.mxu0 0.0
    %2094 = vmatpush2.msra.mxu0 0.0
    %2095 = vmatprep.subr.mxu0 0.0
    %2096 = vmatpush2.msra.mxu0 0.0
    %2097 = vmatprep.subr.mxu0 0.0
    %2098 = vmatpush2.msra.mxu0 0.0
    %2099 = vmatprep.subr.mxu0 0.0
    %2100 = vmatpush2.msra.mxu0 0.0
    %2101 = vmatprep.subr.mxu0 0.0
    %2102 = vmatpush2.msra.mxu0 0.0
    %2103 = vmatprep.subr.mxu0 0.0
    %2104 = vmatpush2.msra.mxu0 0.0
    %2105 = vmatprep.subr.mxu0 0.0
    %2106 = vmatpush2.msra.mxu0 0.0
    %2107 = vmatprep.subr.mxu0 0.0
    %2108 = vmatpush2.msra.mxu0 0.0
    %2109 = vmatprep.subr.mxu0 0.0
    %2110 = vmatpush2.msra.mxu0 0.0
    %2111 = vmatprep.subr.mxu0 0.0
    %2112 = vmatpush2.msra.mxu0 0.0
    %2113 = vmatprep.mubr.f32.mxu0 0.0
    %2114 = vmatmul.mubr.f32.gmra.mxu0 %v2047
    %v2115 = vpop.f32.mrf.mxu0
    %v2116 = vadd.f32 0.0, %v2115
    %v2117 = vpop.f32.mrf.mxu0
    %2118 = vdwg.mxu0
    %v2119 = vadd.f32 %v1887, %v2116
    %v2120 = vadd.f32 %v68, %v1178
    %v2121 = vadd.f32 %v69, %v2119
    %v2122 = vmul.f32 %v2120, %v2120
    %v2123 = vmul.f32 %v2121, %v2121
    %v2124 = vsel %vm72, %v2122, 0.0
    %2125 = vadd.xlane.f32.xlu0 %v2124
    %v2126 = vpop.xlane.xlu0 %2125
    %v2127 = vsel %vm72, %v2123, 0.0
    %2128 = vadd.xlane.f32.xlu0 %v2127
    %v2129 = vpop.xlane.xlu0 %2128
    %v2130 = vmul.f32 %v2126, %v79
    %v2131 = vmul.f32 %v2129, %v79
    %v2132 = vadd.f32 %v2130, 1e-06
    %v2133 = vadd.f32 %v2131, 1e-06
    %v2134 = vrsqrt.pop %v2132
    %v2135 = vrsqrt.pop %v2133
    %v2136 = vmul.f32 %v2120, %v2134
    %v2137 = vmul.f32 %v2121, %v2135
    %v2138 = vld [vmem:[%s5] sm:$0xff]
    %v2139 = vld [vmem:[%s5 + $0x8] sm:$0xff]
    %v2140 = vld [vmem:[%s5 + $0x10] sm:$0xff]
    %v2141 = vld [vmem:[%s5 + $0x18] sm:$0xff]
    %v2143 = vsel %vm72, %v2136, 0
    %v2146 = vsel %vm72, %v2137, 0
    %2148 = vmatprep.subr.mxu0 0.0
    %2149 = vmatpush1.msra.mxu0 0.0
    %2150 = vmatprep.subr.mxu0 0.0
    %2151 = vmatpush1.msra.mxu0 0.0
    %2152 = vmatprep.subr.mxu0 0.0
    %2153 = vmatpush1.msra.mxu0 0.0
    %2154 = vmatprep.subr.mxu0 0.0
    %2155 = vmatpush1.msra.mxu0 0.0
    %2156 = vmatprep.subr.mxu0 0.0
    %2157 = vmatpush1.msra.mxu0 0.0
    %2158 = vmatprep.subr.mxu0 0.0
    %2159 = vmatpush1.msra.mxu0 0.0
    %2160 = vmatprep.subr.mxu0 0.0
    %2161 = vmatpush1.msra.mxu0 0.0
    %2162 = vmatprep.subr.mxu0 0.0
    %2163 = vmatpush1.msra.mxu0 0.0
    %2164 = vmatprep.subr.mxu0 0.0
    %2165 = vmatpush1.msra.mxu0 0.0
    %2166 = vmatprep.subr.mxu0 0.0
    %2167 = vmatpush1.msra.mxu0 0.0
    %2168 = vmatprep.subr.mxu0 0.0
    %2169 = vmatpush1.msra.mxu0 0.0
    %2170 = vmatprep.subr.mxu0 0.0
    %2171 = vmatpush1.msra.mxu0 0.0
    %2172 = vmatprep.subr.mxu0 0.0
    %2173 = vmatpush1.msra.mxu0 %v2141
    %2174 = vmatprep.subr.mxu0 0.0
    %2175 = vmatpush1.msra.mxu0 %v2140
    %2176 = vmatprep.subr.mxu0 0.0
    %2177 = vmatpush1.msra.mxu0 %v2139
    %2178 = vmatprep.subr.mxu0 0.0
    %2179 = vmatpush1.msra.mxu0 %v2138
    %2180 = vmatprep.subr.mxu0 0.0
    %2181 = vmatpush2.msra.mxu0 0.0
    %2182 = vmatprep.subr.mxu0 0.0
    %2183 = vmatpush2.msra.mxu0 0.0
    %2184 = vmatprep.subr.mxu0 0.0
    %2185 = vmatpush2.msra.mxu0 0.0
    %2186 = vmatprep.subr.mxu0 0.0
    %2187 = vmatpush2.msra.mxu0 0.0
    %2188 = vmatprep.subr.mxu0 0.0
    %2189 = vmatpush2.msra.mxu0 0.0
    %2190 = vmatprep.subr.mxu0 0.0
    %2191 = vmatpush2.msra.mxu0 0.0
    %2192 = vmatprep.subr.mxu0 0.0
    %2193 = vmatpush2.msra.mxu0 0.0
    %2194 = vmatprep.subr.mxu0 0.0
    %2195 = vmatpush2.msra.mxu0 0.0
    %2196 = vmatprep.subr.mxu0 0.0
    %2197 = vmatpush2.msra.mxu0 0.0
    %2198 = vmatprep.subr.mxu0 0.0
    %2199 = vmatpush2.msra.mxu0 0.0
    %2200 = vmatprep.subr.mxu0 0.0
    %2201 = vmatpush2.msra.mxu0 0.0
    %2202 = vmatprep.subr.mxu0 0.0
    %2203 = vmatpush2.msra.mxu0 0.0
    %2204 = vmatprep.subr.mxu0 0.0
    %2205 = vmatpush2.msra.mxu0 0.0
    %2206 = vmatprep.subr.mxu0 0.0
    %2207 = vmatpush2.msra.mxu0 0.0
    %2208 = vmatprep.subr.mxu0 0.0
    %2209 = vmatpush2.msra.mxu0 0.0
    %2210 = vmatprep.subr.mxu0 0.0
    %2211 = vmatpush2.msra.mxu0 0.0
    %2212 = vmatprep.mubr.f32.mxu0 0.0
    %2213 = vmatmul.mubr.f32.gmra.mxu0 %v2143
    %v2214 = vpop.f32.mrf.mxu0
    %v2215 = vadd.f32 0.0, %v2214
    %v2216 = vpop.f32.mrf.mxu0
    %2217 = vmatprep.mubr.f32.mxu0 0.0
    %2218 = vmatmul.mubr.f32.gmra.mxu0 %v2146
    %v2219 = vpop.f32.mrf.mxu0
    %v2220 = vadd.f32 0.0, %v2219
    %v2221 = vpop.f32.mrf.mxu0
    %2222 = vdwg.mxu0
    %v2223 = vxor.u32 %v2215, 2147483648
    %v2224 = vxor.u32 %v2220, 2147483648
    %v2225 = vmul.f32 %v2223, 1.442695
    %v2226 = vpow.pop %v2225
    %v2227 = vmul.f32 %v2224, 1.442695
    %v2228 = vpow.pop %v2227
    %v2229 = vadd.f32 %v2226, 1.0
    %v2230 = vadd.f32 %v2228, 1.0
    %v2231 = vrcp.pop %v2229
    %v2232 = vmul.f32 1.0, %v2231
    %v2233 = vrcp.pop %v2230
    %v2234 = vmul.f32 1.0, %v2233
    %v2235 = vmul.f32 %v2215, %v2232
    %v2236 = vmul.f32 %v2220, %v2234
    %2239 = vrot.lane.b32.xlu0 %v2215, 64
    %v2240 = vpop.permute.xlu0 %2239
    %2241 = vrot.lane.b32.xlu0 %v2220, 64
    %v2242 = vpop.permute.xlu0 %2241
    %v2245 = vmul.f32 %v2235, %v2240
    %v2246 = vmul.f32 %v2236, %v2242
    %v2247 = vld [vmem:[%s6] sm:$0xff]
    %v2248 = vld [vmem:[%s6 + $0x8] sm:$0xff]
    %v2249 = vld [vmem:[%s6 + $0x10] sm:$0xff]
    %v2250 = vld [vmem:[%s6 + $0x18] sm:$0xff]
    %v2251 = vld [vmem:[%s6 + $0x20] sm:$0xff]
    %v2252 = vld [vmem:[%s6 + $0x28] sm:$0xff]
    %v2253 = vld [vmem:[%s6 + $0x30] sm:$0xff]
    %v2254 = vld [vmem:[%s6 + $0x38] sm:$0xff]
    %vm2255 = vcmask 523264
    %v2257 = vsel %vm2255, %v2245, 0
    %v2260 = vsel %vm2255, %v2246, 0
    %2262 = vmatprep.subr.mxu0 0.0
    %2263 = vmatpush1.msra.mxu0 0.0
    %2264 = vmatprep.subr.mxu0 0.0
    %2265 = vmatpush1.msra.mxu0 0.0
    %2266 = vmatprep.subr.mxu0 0.0
    %2267 = vmatpush1.msra.mxu0 0.0
    %2268 = vmatprep.subr.mxu0 0.0
    %2269 = vmatpush1.msra.mxu0 0.0
    %2270 = vmatprep.subr.mxu0 0.0
    %2271 = vmatpush1.msra.mxu0 0.0
    %2272 = vmatprep.subr.mxu0 0.0
    %2273 = vmatpush1.msra.mxu0 0.0
    %2274 = vmatprep.subr.mxu0 0.0
    %2275 = vmatpush1.msra.mxu0 0.0
    %2276 = vmatprep.subr.mxu0 0.0
    %2277 = vmatpush1.msra.mxu0 0.0
    %2278 = vmatprep.subr.mxu0 0.0
    %2279 = vmatpush1.msra.mxu0 %v2254
    %2280 = vmatprep.subr.mxu0 0.0
    %2281 = vmatpush1.msra.mxu0 %v2253
    %2282 = vmatprep.subr.mxu0 0.0
    %2283 = vmatpush1.msra.mxu0 %v2252
    %2284 = vmatprep.subr.mxu0 0.0
    %2285 = vmatpush1.msra.mxu0 %v2251
    %2286 = vmatprep.subr.mxu0 0.0
    %2287 = vmatpush1.msra.mxu0 %v2250
    %2288 = vmatprep.subr.mxu0 0.0
    %2289 = vmatpush1.msra.mxu0 %v2249
    %2290 = vmatprep.subr.mxu0 0.0
    %2291 = vmatpush1.msra.mxu0 %v2248
    %2292 = vmatprep.subr.mxu0 0.0
    %2293 = vmatpush1.msra.mxu0 %v2247
    %2294 = vmatprep.subr.mxu0 0.0
    %2295 = vmatpush2.msra.mxu0 0.0
    %2296 = vmatprep.subr.mxu0 0.0
    %2297 = vmatpush2.msra.mxu0 0.0
    %2298 = vmatprep.subr.mxu0 0.0
    %2299 = vmatpush2.msra.mxu0 0.0
    %2300 = vmatprep.subr.mxu0 0.0
    %2301 = vmatpush2.msra.mxu0 0.0
    %2302 = vmatprep.subr.mxu0 0.0
    %2303 = vmatpush2.msra.mxu0 0.0
    %2304 = vmatprep.subr.mxu0 0.0
    %2305 = vmatpush2.msra.mxu0 0.0
    %2306 = vmatprep.subr.mxu0 0.0
    %2307 = vmatpush2.msra.mxu0 0.0
    %2308 = vmatprep.subr.mxu0 0.0
    %2309 = vmatpush2.msra.mxu0 0.0
    %2310 = vmatprep.subr.mxu0 0.0
    %2311 = vmatpush2.msra.mxu0 0.0
    %2312 = vmatprep.subr.mxu0 0.0
    %2313 = vmatpush2.msra.mxu0 0.0
    %2314 = vmatprep.subr.mxu0 0.0
    %2315 = vmatpush2.msra.mxu0 0.0
    %2316 = vmatprep.subr.mxu0 0.0
    %2317 = vmatpush2.msra.mxu0 0.0
    %2318 = vmatprep.subr.mxu0 0.0
    %2319 = vmatpush2.msra.mxu0 0.0
    %2320 = vmatprep.subr.mxu0 0.0
    %2321 = vmatpush2.msra.mxu0 0.0
    %2322 = vmatprep.subr.mxu0 0.0
    %2323 = vmatpush2.msra.mxu0 0.0
    %2324 = vmatprep.subr.mxu0 0.0
    %2325 = vmatpush2.msra.mxu0 0.0
    %2326 = vmatprep.mubr.f32.mxu0 0.0
    %2327 = vmatmul.mubr.f32.gmra.mxu0 %v2257
    %v2328 = vpop.f32.mrf.mxu0
    %v2329 = vadd.f32 0.0, %v2328
    %v2330 = vpop.f32.mrf.mxu0
    %2331 = vmatprep.mubr.f32.mxu0 0.0
    %2332 = vmatmul.mubr.f32.gmra.mxu0 %v2260
    %v2333 = vpop.f32.mrf.mxu0
    %v2334 = vadd.f32 0.0, %v2333
    %v2335 = vpop.f32.mrf.mxu0
    %2336 = vdwg.mxu0
    %v2337 = vadd.f32 %v2120, %v2329
    %v2338 = vadd.f32 %v2121, %v2334
    %2339 = vst.msk [vmem:[#allocation8] sm:$0xff] %vm72, %v2337
    %2340 = vst.msk [vmem:[#allocation8 + $0x8] sm:$0xff] %vm72, %v2338
    // Predicated region
    $region42: #{tpu_custom_call.1} parent=1 // pred_check
      _
    $region43: #{tpu_custom_call.1} parent=1 // pred_check_branch
      %2342 = sbr.rel (0) target = $region45
    $region44: #{tpu_custom_call.1} parent=1 // pred_region
      %s2344 = ssub.s32 256, 256
      %2345 = vsyncadd [#allocation4], %s2344
      %s2346 = sshll.u32 [#allocation8], 4
      %s2347 = int_to_ptr.vmem [resolvable:$true] %s2346
      %2352 = dma.vmem_to_hbm [thread:$0]  %s2347, 256, %s7, [#allocation4], 128, 128, 8
    $region45: #{tpu_custom_call.1} parent=1 // pred_fallthru
      _
    // Predicated region
    $region46: #{tpu_custom_call.1} parent=1 // pred_check
      _
    $region47: #{tpu_custom_call.1} parent=1 // pred_check_branch
      %2354 = sbr.rel (0) target = $region49
    $region48: #{tpu_custom_call.1} parent=1 // pred_region
      %2355 = dma.done [#allocation4], 256
    $region49: #{tpu_custom_call.1} parent=1 // pred_fallthru
      _
    %2356 = vsyncpa [#allocation3], 1
    %2357 = vsyncpa [#allocation6], 1
    %2358 = vsyncpa [#allocation4], 1

</llo_original>
